<compile_context>
chip_gen: v5e
topology: v5e:2x2
jax: 0.10.0
libtpu: 0.0.40
codegen_flags: <defaults>
</compile_context>

<pallas_src>
import numpy as np
import jax
import jax.numpy as jnp
from jax.experimental import pallas as pl
from jax.experimental.pallas import tpu as pltpu

# ---------------- problem sizes (GLAMBlock(dim=C, kernel_size=3)) -------------
N, C, H, W = 2, 8, 8, 8
HW = H * W
CR = C // 2                  # reduced channels inside the spatial attentions
KS = 3                       # channel-attention Conv1d kernel size (odd)
HID = int(C * 4.0)           # mlp hidden dim (mlp_ratio = 4.0)
EPS = 1e-6                   # GLAMBlock is constructed with eps=1e-06
NPROJ = 3 * CR + C           # packed projection rows: [W1 | Wq | Wk | Watt@Wv]


def _gelu_tanh(x):
    # TODO(synk): torch nn.GELU default is the exact erf GELU; tanh
    # approximation is used because erf has no guaranteed Mosaic lowering.
    return 0.5 * x * (1.0 + jnp.tanh(0.7978845608028654 * (x + 0.044715 * x * x * x)))


# ------------------------------- fused kernel ----------------------------------
def _glam_kernel(x_ref, sc_ref, wp_ref, kmat_ref, colp_ref, wm1_ref, wm2_ref,
                 o_ref):
    # Loop-invariant weight / bias loads (hoisted out of the static batch loop).
    wp = wp_ref[...]                           # (NPROJ, C)   bf16
    wm1 = wm1_ref[...]                         # (HID, C)     bf16
    wm2 = wm2_ref[...]                         # (C, HID)     bf16
    bm1 = colp_ref[:, 0:1]                     # (HID, 1)
    batt = colp_ref[0:C, 1:2]
    g1, be1 = colp_ref[0:C, 2:3], colp_ref[0:C, 3:4]
    g2, be2 = colp_ref[0:C, 4:5], colp_ref[0:C, 5:6]
    bm2 = colp_ref[0:C, 6:7]
    pbias = colp_ref[0:NPROJ, 7:8]             # packed-projection bias column
    ch = jax.lax.broadcasted_iota(jnp.int32, (C, 1), 0)

    outs = []
    for n in range(N):                         # static unroll over tiny batch
        xc = x_ref[n]                          # (C, HW) f32, channel-major
        xbf = xc.astype(jnp.bfloat16)

        # ---- GAP + 3-tap Conv1d channel attentions (VPU on the GAP vector) --
        gap = jnp.mean(xc, axis=1, keepdims=True)                    # (C, 1)
        gap_dn = jnp.where(ch >= 1, jnp.roll(gap, 1, axis=0), 0.0)   # gap[c-1]
        gap_up = jnp.where(ch <= C - 2, jnp.roll(gap, -1, axis=0), 0.0)

        # LocalChannelAttention:  x * sigmoid(conv1d(gap)) + x
        a_l = jax.nn.sigmoid(sc_ref[0] * gap_dn + sc_ref[1] * gap
                             + sc_ref[2] * gap_up + sc_ref[3])
        xl = xc * a_l + xc

        # GlobalChannelAttention (forward uses conv_q for both query and key)
        qv = jax.nn.sigmoid(sc_ref[4] * gap_dn + sc_ref[5] * gap
                            + sc_ref[6] * gap_up + sc_ref[7])        # (C, 1)
        qk = jax.lax.dot_general(qv, qv, (((1,), (1,)), ((), ())),
                                 preferred_element_type=jnp.float32)  # (C, C)
        qk = jnp.exp(qk - jnp.max(qk))
        qk = qk / jnp.sum(qk)                                        # softmax C*C
        xg = xc * jnp.dot(qk.astype(jnp.bfloat16), xbf,
                          preferred_element_type=jnp.float32)

        # ---- packed 1x1 projections: [att1 | q | k | Watt@v] one MXU matmul -
        proj = jnp.dot(wp, xbf, preferred_element_type=jnp.float32) + pbias
        att1 = proj[0:CR]
        qs = proj[CR:2 * CR]
        ks = proj[2 * CR:3 * CR]
        vw = proj[3 * CR:]                                           # (C, HW)

        # ---- GlobalSpatialAttention (flattened HW*HW softmax) ---------------
        qks = jax.lax.dot_general(ks.astype(jnp.bfloat16),
                                  qs.astype(jnp.bfloat16),
                                  (((0,), (0,)), ((), ())),
                                  preferred_element_type=jnp.float32)  # (HW,HW)
        e = jnp.exp(qks - jnp.max(qks))
        sm = e / jnp.sum(e)
        outg = jnp.dot(vw.astype(jnp.bfloat16), sm.astype(jnp.bfloat16),
                       preferred_element_type=jnp.float32) + batt
        gatt = xg * outg + xg

        # ---- LocalSpatialAttention: folded dilated-conv operator on the MXU -
        # s[l] = sum_{c,m} att1[c,m] * K[c,m,l] + s_bias   (dilated taps,
        # boundary masks and conv1x1_2 are all folded into K at pack time).
        att1_bf = att1.astype(jnp.bfloat16)
        s = jnp.dot(att1_bf[0:1, :], kmat_ref[0],
                    preferred_element_type=jnp.float32)
        for c in range(1, CR):
            s = s + jnp.dot(att1_bf[c:c + 1, :], kmat_ref[c],
                            preferred_element_type=jnp.float32)
        s = s + sc_ref[11]                                           # (1, HW)
        latt = xl * s + xl

        # ---- GLAM fusion + residual + LayerNorm1 ----------------------------
        y = xc + (sc_ref[8] * latt + sc_ref[9] * xc + sc_ref[10] * gatt)
        mu = jnp.mean(y, axis=0, keepdims=True)
        var = jnp.mean((y - mu) ** 2, axis=0, keepdims=True)
        y = (y - mu) * jax.lax.rsqrt(var + EPS) * g1 + be1

        # ---- MLP (fc1 -> GELU -> fc2) + residual + LayerNorm2 ---------------
        hmid = _gelu_tanh(jnp.dot(wm1, y.astype(jnp.bfloat16),
                                  preferred_element_type=jnp.float32) + bm1)
        z = (y + jnp.dot(wm2, hmid.astype(jnp.bfloat16),
                         preferred_element_type=jnp.float32) + bm2)
        mu2 = jnp.mean(z, axis=0, keepdims=True)
        var2 = jnp.mean((z - mu2) ** 2, axis=0, keepdims=True)
        outs.append((z - mu2) * jax.lax.rsqrt(var2 + EPS) * g2 + be2)

    # lane-dense store: batches side by side -> one unmasked (C, N*HW) store
    o_ref[...] = jnp.concatenate(outs, axis=1)


# ------------------------------- parameters (torch-like) -----------------------
def make_params(seed=42):
    keys = jax.random.split(jax.random.PRNGKey(seed), 24)
    r = lambda i, shape, s=0.1: s * jax.random.normal(keys[i], shape, jnp.float32)
    p = {}
    p['wl'], p['bl'] = r(0, (KS,), 0.3), jnp.asarray([0.05], jnp.float32)
    p['wq'], p['bq'] = r(1, (KS,), 0.3), jnp.asarray([-0.05], jnp.float32)
    p['W1'], p['b1'] = r(2, (CR, C)), r(3, (CR,))                      # conv1x1_1
    p['w3'], p['w5'], p['w7'] = (r(4, (CR, CR, 3, 3)), r(5, (CR, CR, 3, 3)),
                                 r(6, (CR, CR, 3, 3)))
    p['b3'], p['b5'], p['b7'] = r(7, (CR,)), r(8, (CR,)), r(9, (CR,))
    p['w2'], p['b2'] = r(10, (4 * CR,)), r(11, (1,))                   # conv1x1_2
    p['Wqs'], p['bqs'] = r(12, (CR, C)), r(13, (CR,))
    p['Wks'], p['bks'] = r(14, (CR, C)), r(15, (CR,))
    p['Wvs'], p['bvs'] = r(16, (CR, C)), r(17, (CR,))
    p['Watt'], p['batt'] = r(18, (C, CR)), r(19, (C,))
    p['fusion'] = jnp.asarray([0.333, 0.333, 0.333], jnp.float32)
    p['g1'], p['be1'] = jnp.ones((C,), jnp.float32), jnp.zeros((C,), jnp.float32)
    p['g2'], p['be2'] = jnp.ones((C,), jnp.float32), jnp.zeros((C,), jnp.float32)
    p['Wm1'], p['bm1'] = r(20, (HID, C)), r(21, (HID,))
    p['Wm2'], p['bm2'] = r(22, (C, HID)), r(23, (C,))
    return p


def pack_params(p):
    """Pack / fold torch-like parameters into the few kernel operands."""
    fw = jax.nn.softmax(p['fusion'])
    w2 = p['w2']
    s_bias = (p['b2'][0] + jnp.dot(w2[CR:2 * CR], p['b3'])
              + jnp.dot(w2[2 * CR:3 * CR], p['b5'])
              + jnp.dot(w2[3 * CR:], p['b7']))
    sc = jnp.concatenate([p['wl'], p['bl'], p['wq'], p['bq'], fw,
                          jnp.reshape(s_bias, (1,)),
                          jnp.zeros((4,), jnp.float32)])               # (16,)

    # packed 1x1 projections [W1 | Wq | Wk | Watt@Wv] (weights bf16) + f32 bias
    wwv = p['Watt'] @ p['Wvs']                                         # (C, C)
    bwv = p['Watt'] @ p['bvs']                                         # (C,)
    wmat = jnp.concatenate([p['W1'], p['Wqs'], p['Wks'], wwv], axis=0)
    bcol = jnp.concatenate([p['b1'], p['bqs'], p['bks'], bwv])         # (NPROJ,)

    # Dense folded dilated-conv gate operator:
    #   s[l] = sum_{ci,m} att1[ci,m] * K[ci,m,l] + s_bias
    # (direct att1 term + three dilated 3x3 convs, with conv1x1_2 and the
    #  zero-padding boundary masks folded in at pack time).
    w2n = np.asarray(w2, np.float32)
    kmat = np.zeros((CR, HW, HW), np.float32)
    diag = np.arange(HW)
    kmat[:, diag, diag] += w2n[:CR][:, None]                           # direct term
    for d, wk, w2blk in ((1, p['w3'], w2n[CR:2 * CR]),
                         (2, p['w5'], w2n[2 * CR:3 * CR]),
                         (3, p['w7'], w2n[3 * CR:])):
        tap = np.einsum('o,oiyx->iyx', w2blk, np.asarray(wk, np.float32))  # (CR,3,3)
        for ky in range(3):
            for kx in range(3):
                dy, dx = (ky - 1) * d, (kx - 1) * d
                for ho in range(H):
                    hi = ho + dy
                    if hi < 0 or hi >= H:
                        continue
                    for wo in range(W):
                        wi = wo + dx
                        if wi < 0 or wi >= W:
                            continue
                        kmat[:, hi * W + wi, ho * W + wo] += tap[:, ky, kx]

    # packed per-channel columns:
    # [bm1 | batt | g1 | be1 | g2 | be2 | bm2 | packed-proj bias]
    colp = np.zeros((HID, 8), np.float32)
    colp[:, 0] = np.asarray(p['bm1'])
    for j, v in enumerate([p['batt'], p['g1'], p['be1'],
                           p['g2'], p['be2'], p['bm2']], start=1):
        colp[:C, j] = np.asarray(v)
    colp[:NPROJ, 7] = np.asarray(bcol)

    return {'scal': sc.astype(jnp.float32),
            'wp': wmat.astype(jnp.bfloat16),
            'kmat': jnp.asarray(kmat, jnp.bfloat16),
            'colp': jnp.asarray(colp, jnp.float32),
            'wm1': p['Wm1'].astype(jnp.bfloat16),
            'wm2': p['Wm2'].astype(jnp.bfloat16)}


# ------------------------------- forward wrapper -------------------------------
def glam_block_forward(x_nchw, kp):
    n, c, h, w = x_nchw.shape
    hw = h * w
    xc = x_nchw.reshape(n, c, hw)             # channel-major tokens (NCHW flatten(2))

    vm = pl.BlockSpec(memory_space=pltpu.MemorySpace.VMEM)
    smem = pl.BlockSpec(memory_space=pltpu.MemorySpace.SMEM)

    out_cm = pl.pallas_call(
        _glam_kernel,
        out_shape=jax.ShapeDtypeStruct((c, n * hw), jnp.float32),
        in_specs=[vm, smem, vm, vm, vm, vm, vm],
        out_specs=vm,
    )(xc, kp['scal'], kp['wp'], kp['kmat'], kp['colp'], kp['wm1'], kp['wm2'])
    # (C, N*HW) lane-dense slab -> module output layout (N, L, C)
    return jnp.transpose(out_cm.reshape(c, n, hw), (1, 2, 0))


# ------------------------------- pure-JAX reference ----------------------------
def _ln(x, g, b):
    mu = jnp.mean(x, axis=-1, keepdims=True)
    var = jnp.mean((x - mu) ** 2, axis=-1, keepdims=True)
    return (x - mu) * jax.lax.rsqrt(var + EPS) * g + b


def glam_block_ref(x_nchw, p):
    n, c, h, w = x_nchw.shape
    hw = h * w
    x_tok = jnp.transpose(x_nchw, (0, 2, 3, 1)).reshape(n, hw, c)
    gap = jnp.mean(x_tok, axis=1, keepdims=True)                      # (n, 1, c)

    def conv1d3(g, wk, bk):
        gp = jnp.pad(g, ((0, 0), (0, 0), (1, 1)))
        return (wk[0] * gp[:, :, 0:c] + wk[1] * gp[:, :, 1:c + 1]
                + wk[2] * gp[:, :, 2:c + 2] + bk)

    a_l = jax.nn.sigmoid(conv1d3(gap, p['wl'], p['bl']))
    xl = x_tok * a_l + x_tok
    qv = jax.nn.sigmoid(conv1d3(gap, p['wq'], p['bq']))
    qk = jnp.einsum('nia,nib->nab', qv, qv)
    qk = jax.nn.softmax(qk.reshape(n, -1), -1).reshape(n, c, c)
    xg = x_tok * jnp.einsum('nla,nab->nlb', x_tok, qk)

    q = x_tok @ p['Wqs'].T + p['bqs']
    k = x_tok @ p['Wks'].T + p['bks']
    v = x_tok @ p['Wvs'].T + p['bvs']
    qks = jnp.einsum('nic,njc->nij', k, q)
    sm = jax.nn.softmax(qks.reshape(n, -1), -1).reshape(n, hw, hw)
    attg = jnp.einsum('nij,nic->njc', sm, v)
    gatt = xg * (attg @ p['Watt'].T + p['batt']) + xg

    att1 = x_tok @ p['W1'].T + p['b1']
    a_nhwc = att1.reshape(n, h, w, CR)

    def dconv(wk, bk, d):
        o = jax.lax.conv_general_dilated(
            a_nhwc, jnp.transpose(wk, (2, 3, 1, 0)), (1, 1), ((d, d), (d, d)),
            rhs_dilation=(d, d), dimension_numbers=('NHWC', 'HWIO', 'NHWC'))
        return (o + bk).reshape(n, hw, CR)

    d1 = dconv(p['w3'], p['b3'], 1)
    d2 = dconv(p['w5'], p['b5'], 2)
    d3 = dconv(p['w7'], p['b7'], 3)
    cat = jnp.concatenate([att1, d1, d2, d3], axis=-1)
    s = cat @ p['w2'].reshape(4 * CR, 1) + p['b2']
    latt = xl * s + xl

    fw = jax.nn.softmax(p['fusion'])
    fused = fw[0] * latt + fw[1] * x_tok + fw[2] * gatt
    y = _ln(x_tok + fused, p['g1'], p['be1'])
    z = y + _gelu_tanh(y @ p['Wm1'].T + p['bm1']) @ p['Wm2'].T + p['bm2']
    return _ln(z, p['g2'], p['be2'])


# ------------------------------------ main --------------------------------------
if __name__ == "__main__":
    params = make_params()
    kparams = pack_params(params)
    x = jax.random.normal(jax.random.PRNGKey(0), (N, C, H, W), jnp.float32)

    out = jax.block_until_ready(jax.jit(glam_block_forward)(x, kparams))
    ref = jax.block_until_ready(glam_block_ref(x, params))

    assert out.shape == (N, HW, C)
    diff = float(np.max(np.abs(np.asarray(out) - np.asarray(ref))))
    # bf16 MXU inputs (f32 accumulation) vs. the all-f32 reference.
    assert np.allclose(np.asarray(out), np.asarray(ref), rtol=3e-2, atol=3e-2), (
        "max abs diff %g" % diff)
    print("KERNEL_OK")
</pallas_src>

<mosaic_0001>
module attributes {stable_mosaic.version = 11 : i64} {
  func.func @_glam_kernel(%arg0: memref<2x8x64xf32, #tpu.memory_space<vmem>>, %arg1: memref<16xf32, #tpu.memory_space<smem>>, %arg2: memref<20x8xbf16, #tpu.memory_space<vmem>>, %arg3: memref<4x64x64xbf16, #tpu.memory_space<vmem>>, %arg4: memref<32x8xf32, #tpu.memory_space<vmem>>, %arg5: memref<32x8xbf16, #tpu.memory_space<vmem>>, %arg6: memref<8x32xbf16, #tpu.memory_space<vmem>>, %arg7: memref<8x128xf32, #tpu.memory_space<vmem>>) attributes {dimension_semantics = [], scalar_prefetch = 0 : i64, scratch_operands = 0 : i64, tpu.core_type = #tpu.core_type<tc>} {
    %c0 = arith.constant 0 : index
    %c0_0 = arith.constant 0 : index
    %0 = vector.load %arg2[%c0, %c0_0] : memref<20x8xbf16, #tpu.memory_space<vmem>>, vector<20x8xbf16>
    %c0_1 = arith.constant 0 : index
    %c0_2 = arith.constant 0 : index
    %1 = vector.load %arg5[%c0_1, %c0_2] : memref<32x8xbf16, #tpu.memory_space<vmem>>, vector<32x8xbf16>
    %c0_3 = arith.constant 0 : index
    %c0_4 = arith.constant 0 : index
    %2 = vector.load %arg6[%c0_3, %c0_4] : memref<8x32xbf16, #tpu.memory_space<vmem>>, vector<8x32xbf16>
    %c0_5 = arith.constant 0 : index
    %c0_6 = arith.constant 0 : index
    %3 = vector.load %arg4[%c0_5, %c0_6] : memref<32x8xf32, #tpu.memory_space<vmem>>, vector<32x1xf32>
    %c0_7 = arith.constant 0 : index
    %c1 = arith.constant 1 : index
    %4 = vector.load %arg4[%c0_7, %c1] : memref<32x8xf32, #tpu.memory_space<vmem>>, vector<8x1xf32>
    %c0_8 = arith.constant 0 : index
    %c2 = arith.constant 2 : index
    %5 = vector.load %arg4[%c0_8, %c2] : memref<32x8xf32, #tpu.memory_space<vmem>>, vector<8x1xf32>
    %c0_9 = arith.constant 0 : index
    %c3 = arith.constant 3 : index
    %6 = vector.load %arg4[%c0_9, %c3] : memref<32x8xf32, #tpu.memory_space<vmem>>, vector<8x1xf32>
    %c0_10 = arith.constant 0 : index
    %c4 = arith.constant 4 : index
    %7 = vector.load %arg4[%c0_10, %c4] : memref<32x8xf32, #tpu.memory_space<vmem>>, vector<8x1xf32>
    %c0_11 = arith.constant 0 : index
    %c5 = arith.constant 5 : index
    %8 = vector.load %arg4[%c0_11, %c5] : memref<32x8xf32, #tpu.memory_space<vmem>>, vector<8x1xf32>
    %c0_12 = arith.constant 0 : index
    %c6 = arith.constant 6 : index
    %9 = vector.load %arg4[%c0_12, %c6] : memref<32x8xf32, #tpu.memory_space<vmem>>, vector<8x1xf32>
    %c0_13 = arith.constant 0 : index
    %c7 = arith.constant 7 : index
    %10 = vector.load %arg4[%c0_13, %c7] : memref<32x8xf32, #tpu.memory_space<vmem>>, vector<20x1xf32>
    %11 = tpu.iota {dimensions = array<i32: 0>} : vector<8x1xi32>
    %c0_14 = arith.constant 0 : index
    %c0_15 = arith.constant 0 : index
    %c0_16 = arith.constant 0 : index
    %12 = vector.load %arg0[%c0_14, %c0_15, %c0_16] : memref<2x8x64xf32, #tpu.memory_space<vmem>>, vector<1x8x64xf32>
    %13 = vector.shape_cast %12 : vector<1x8x64xf32> to vector<8x64xf32>
    %14 = arith.truncf %13 : vector<8x64xf32> to vector<8x64xbf16>
    %cst = arith.constant dense<0.000000e+00> : vector<8xf32>
    %15 = vector.multi_reduction <add>, %13, %cst [1] : vector<8x64xf32> to vector<8xf32>
    %16 = vector.shape_cast %15 : vector<8xf32> to vector<8x1xf32>
    %cst_17 = arith.constant 6.400000e+01 : f32
    %17 = vector.broadcast %cst_17 : f32 to vector<8x1xf32>
    %18 = arith.divf %16, %17 : vector<8x1xf32>
    %c1_i32 = arith.constant 1 : i32
    %19 = vector.broadcast %c1_i32 : i32 to vector<8x1xi32>
    %20 = arith.cmpi sge, %11, %19 : vector<8x1xi32>
    %21 = vector.extract_strided_slice %18 {offsets = [7, 0], sizes = [1, 1], strides = [1, 1]} : vector<8x1xf32> to vector<1x1xf32>
    %22 = vector.extract_strided_slice %18 {offsets = [0, 0], sizes = [7, 1], strides = [1, 1]} : vector<8x1xf32> to vector<7x1xf32>
    %23 = tpu.concatenate %21, %22 in 0 : vector<1x1xf32>, vector<7x1xf32> -> vector<8x1xf32>
    %cst_18 = arith.constant 0.000000e+00 : f32
    %24 = vector.broadcast %cst_18 : f32 to vector<8x1xf32>
    %25 = arith.select %20, %23, %24 : vector<8x1xi1>, vector<8x1xf32>
    %c6_i32 = arith.constant 6 : i32
    %26 = vector.broadcast %c6_i32 : i32 to vector<8x1xi32>
    %27 = arith.cmpi sle, %11, %26 : vector<8x1xi32>
    %28 = vector.extract_strided_slice %18 {offsets = [1, 0], sizes = [7, 1], strides = [1, 1]} : vector<8x1xf32> to vector<7x1xf32>
    %29 = vector.extract_strided_slice %18 {offsets = [0, 0], sizes = [1, 1], strides = [1, 1]} : vector<8x1xf32> to vector<1x1xf32>
    %30 = tpu.concatenate %28, %29 in 0 : vector<7x1xf32>, vector<1x1xf32> -> vector<8x1xf32>
    %cst_19 = arith.constant 0.000000e+00 : f32
    %31 = vector.broadcast %cst_19 : f32 to vector<8x1xf32>
    %32 = arith.select %27, %30, %31 : vector<8x1xi1>, vector<8x1xf32>
    %c0_20 = arith.constant 0 : index
    %33 = memref.load %arg1[%c0_20] : memref<16xf32, #tpu.memory_space<smem>>
    %34 = vector.broadcast %33 : f32 to vector<8x1xf32>
    %35 = arith.mulf %34, %25 : vector<8x1xf32>
    %c1_21 = arith.constant 1 : index
    %36 = memref.load %arg1[%c1_21] : memref<16xf32, #tpu.memory_space<smem>>
    %37 = vector.broadcast %36 : f32 to vector<8x1xf32>
    %38 = arith.mulf %37, %18 : vector<8x1xf32>
    %39 = arith.addf %35, %38 : vector<8x1xf32>
    %c2_22 = arith.constant 2 : index
    %40 = memref.load %arg1[%c2_22] : memref<16xf32, #tpu.memory_space<smem>>
    %41 = vector.broadcast %40 : f32 to vector<8x1xf32>
    %42 = arith.mulf %41, %32 : vector<8x1xf32>
    %43 = arith.addf %39, %42 : vector<8x1xf32>
    %c3_23 = arith.constant 3 : index
    %44 = memref.load %arg1[%c3_23] : memref<16xf32, #tpu.memory_space<smem>>
    %45 = vector.broadcast %44 : f32 to vector<8x1xf32>
    %46 = arith.addf %43, %45 : vector<8x1xf32>
    %47 = arith.negf %46 : vector<8x1xf32>
    %48 = math.exp %47 : vector<8x1xf32>
    %cst_24 = arith.constant 1.000000e+00 : f32
    %49 = vector.broadcast %cst_24 : f32 to vector<8x1xf32>
    %50 = arith.addf %49, %48 : vector<8x1xf32>
    %51 = arith.divf %49, %50 : vector<8x1xf32>
    %52 = vector.broadcast %51 : vector<8x1xf32> to vector<8x64xf32>
    %53 = arith.mulf %13, %52 : vector<8x64xf32>
    %54 = arith.addf %53, %13 : vector<8x64xf32>
    %c4_25 = arith.constant 4 : index
    %55 = memref.load %arg1[%c4_25] : memref<16xf32, #tpu.memory_space<smem>>
    %56 = vector.broadcast %55 : f32 to vector<8x1xf32>
    %57 = arith.mulf %56, %25 : vector<8x1xf32>
    %c5_26 = arith.constant 5 : index
    %58 = memref.load %arg1[%c5_26] : memref<16xf32, #tpu.memory_space<smem>>
    %59 = vector.broadcast %58 : f32 to vector<8x1xf32>
    %60 = arith.mulf %59, %18 : vector<8x1xf32>
    %61 = arith.addf %57, %60 : vector<8x1xf32>
    %c6_27 = arith.constant 6 : index
    %62 = memref.load %arg1[%c6_27] : memref<16xf32, #tpu.memory_space<smem>>
    %63 = vector.broadcast %62 : f32 to vector<8x1xf32>
    %64 = arith.mulf %63, %32 : vector<8x1xf32>
    %65 = arith.addf %61, %64 : vector<8x1xf32>
    %c7_28 = arith.constant 7 : index
    %66 = memref.load %arg1[%c7_28] : memref<16xf32, #tpu.memory_space<smem>>
    %67 = vector.broadcast %66 : f32 to vector<8x1xf32>
    %68 = arith.addf %65, %67 : vector<8x1xf32>
    %69 = arith.negf %68 : vector<8x1xf32>
    %70 = math.exp %69 : vector<8x1xf32>
    %cst_29 = arith.constant 1.000000e+00 : f32
    %71 = vector.broadcast %cst_29 : f32 to vector<8x1xf32>
    %72 = arith.addf %71, %70 : vector<8x1xf32>
    %73 = arith.divf %71, %72 : vector<8x1xf32>
    %cst_30 = arith.constant dense<0.000000e+00> : vector<8x8xf32>
    %74 = tpu.matmul %73, %73, %cst_30 {dimension_numbers = #tpu.dot_dimension_numbers<[1], [1], [0], [0], [0, 0, 1, 0], [], []>} : vector<8x1xf32>, vector<8x1xf32>, vector<8x8xf32> -> vector<8x8xf32>
    %75 = vector.shape_cast %74 : vector<8x8xf32> to vector<1x8x8xf32>
    %cst_31 = arith.constant dense<0xFF800000> : vector<1xf32>
    %76 = vector.multi_reduction <maximumf>, %75, %cst_31 [1, 2] : vector<1x8x8xf32> to vector<1xf32>
    %77 = vector.shape_cast %76 : vector<1xf32> to vector<1x1x1xf32>
    %78 = vector.extract %77[0, 0, 0] : f32 from vector<1x1x1xf32>
    %79 = vector.broadcast %78 : f32 to vector<8x8xf32>
    %80 = arith.subf %74, %79 : vector<8x8xf32>
    %81 = math.exp %80 : vector<8x8xf32>
    %82 = vector.shape_cast %81 : vector<8x8xf32> to vector<1x8x8xf32>
    %cst_32 = arith.constant dense<0.000000e+00> : vector<1xf32>
    %83 = vector.multi_reduction <add>, %82, %cst_32 [1, 2] : vector<1x8x8xf32> to vector<1xf32>
    %84 = vector.shape_cast %83 : vector<1xf32> to vector<1x1x1xf32>
    %85 = vector.extract %84[0, 0, 0] : f32 from vector<1x1x1xf32>
    %86 = vector.broadcast %85 : f32 to vector<8x8xf32>
    %87 = arith.divf %81, %86 : vector<8x8xf32>
    %88 = arith.truncf %87 : vector<8x8xf32> to vector<8x8xbf16>
    %cst_33 = arith.constant dense<0.000000e+00> : vector<8x64xf32>
    %89 = tpu.matmul %88, %14, %cst_33 {dimension_numbers = #tpu.dot_dimension_numbers<[1], [0], [0], [1], [0, 0, 1, 1], [], []>} : vector<8x8xbf16>, vector<8x64xbf16>, vector<8x64xf32> -> vector<8x64xf32>
    %90 = arith.mulf %13, %89 : vector<8x64xf32>
    %cst_34 = arith.constant dense<0.000000e+00> : vector<20x64xf32>
    %91 = tpu.matmul %0, %14, %cst_34 {dimension_numbers = #tpu.dot_dimension_numbers<[1], [0], [0], [1], [0, 0, 1, 1], [], []>} : vector<20x8xbf16>, vector<8x64xbf16>, vector<20x64xf32> -> vector<20x64xf32>
    %92 = vector.broadcast %10 : vector<20x1xf32> to vector<20x64xf32>
    %93 = arith.addf %91, %92 : vector<20x64xf32>
    %94 = vector.extract_strided_slice %93 {offsets = [0, 0], sizes = [4, 64], strides = [1, 1]} : vector<20x64xf32> to vector<4x64xf32>
    %95 = vector.extract_strided_slice %93 {offsets = [4, 0], sizes = [4, 64], strides = [1, 1]} : vector<20x64xf32> to vector<4x64xf32>
    %96 = vector.extract_strided_slice %93 {offsets = [8, 0], sizes = [4, 64], strides = [1, 1]} : vector<20x64xf32> to vector<4x64xf32>
    %97 = vector.extract_strided_slice %93 {offsets = [12, 0], sizes = [8, 64], strides = [1, 1]} : vector<20x64xf32> to vector<8x64xf32>
    %98 = arith.truncf %96 : vector<4x64xf32> to vector<4x64xbf16>
    %99 = arith.truncf %95 : vector<4x64xf32> to vector<4x64xbf16>
    %cst_35 = arith.constant dense<0.000000e+00> : vector<64x64xf32>
    %100 = tpu.matmul %98, %99, %cst_35 {dimension_numbers = #tpu.dot_dimension_numbers<[0], [0], [1], [1], [0, 1, 1, 1], [], []>} : vector<4x64xbf16>, vector<4x64xbf16>, vector<64x64xf32> -> vector<64x64xf32>
    %101 = vector.shape_cast %100 : vector<64x64xf32> to vector<1x64x64xf32>
    %cst_36 = arith.constant dense<0xFF800000> : vector<1xf32>
    %102 = vector.multi_reduction <maximumf>, %101, %cst_36 [1, 2] : vector<1x64x64xf32> to vector<1xf32>
    %103 = vector.shape_cast %102 : vector<1xf32> to vector<1x1x1xf32>
    %104 = vector.extract %103[0, 0, 0] : f32 from vector<1x1x1xf32>
    %105 = vector.broadcast %104 : f32 to vector<64x64xf32>
    %106 = arith.subf %100, %105 : vector<64x64xf32>
    %107 = math.exp %106 : vector<64x64xf32>
    %108 = vector.shape_cast %107 : vector<64x64xf32> to vector<1x64x64xf32>
    %cst_37 = arith.constant dense<0.000000e+00> : vector<1xf32>
    %109 = vector.multi_reduction <add>, %108, %cst_37 [1, 2] : vector<1x64x64xf32> to vector<1xf32>
    %110 = vector.shape_cast %109 : vector<1xf32> to vector<1x1x1xf32>
    %111 = vector.extract %110[0, 0, 0] : f32 from vector<1x1x1xf32>
    %112 = vector.broadcast %111 : f32 to vector<64x64xf32>
    %113 = arith.divf %107, %112 : vector<64x64xf32>
    %114 = arith.truncf %97 : vector<8x64xf32> to vector<8x64xbf16>
    %115 = arith.truncf %113 : vector<64x64xf32> to vector<64x64xbf16>
    %cst_38 = arith.constant dense<0.000000e+00> : vector<8x64xf32>
    %116 = tpu.matmul %114, %115, %cst_38 {dimension_numbers = #tpu.dot_dimension_numbers<[1], [0], [0], [1], [0, 0, 1, 1], [], []>} : vector<8x64xbf16>, vector<64x64xbf16>, vector<8x64xf32> -> vector<8x64xf32>
    %117 = vector.broadcast %4 : vector<8x1xf32> to vector<8x64xf32>
    %118 = arith.addf %116, %117 : vector<8x64xf32>
    %119 = arith.mulf %90, %118 : vector<8x64xf32>
    %120 = arith.addf %119, %90 : vector<8x64xf32>
    %121 = arith.truncf %94 : vector<4x64xf32> to vector<4x64xbf16>
    %122 = vector.extract_strided_slice %121 {offsets = [0, 0], sizes = [1, 64], strides = [1, 1]} : vector<4x64xbf16> to vector<1x64xbf16>
    %c0_39 = arith.constant 0 : index
    %c0_40 = arith.constant 0 : index
    %c0_41 = arith.constant 0 : index
    %123 = vector.load %arg3[%c0_39, %c0_40, %c0_41] : memref<4x64x64xbf16, #tpu.memory_space<vmem>>, vector<1x64x64xbf16>
    %124 = vector.shape_cast %123 : vector<1x64x64xbf16> to vector<64x64xbf16>
    %cst_42 = arith.constant dense<0.000000e+00> : vector<1x64xf32>
    %125 = tpu.matmul %122, %124, %cst_42 {dimension_numbers = #tpu.dot_dimension_numbers<[1], [0], [0], [1], [0, 0, 1, 1], [], []>} : vector<1x64xbf16>, vector<64x64xbf16>, vector<1x64xf32> -> vector<1x64xf32>
    %126 = vector.extract_strided_slice %121 {offsets = [1, 0], sizes = [1, 64], strides = [1, 1]} : vector<4x64xbf16> to vector<1x64xbf16>
    %c1_43 = arith.constant 1 : index
    %c0_44 = arith.constant 0 : index
    %c0_45 = arith.constant 0 : index
    %127 = vector.load %arg3[%c1_43, %c0_44, %c0_45] : memref<4x64x64xbf16, #tpu.memory_space<vmem>>, vector<1x64x64xbf16>
    %128 = vector.shape_cast %127 : vector<1x64x64xbf16> to vector<64x64xbf16>
    %cst_46 = arith.constant dense<0.000000e+00> : vector<1x64xf32>
    %129 = tpu.matmul %126, %128, %cst_46 {dimension_numbers = #tpu.dot_dimension_numbers<[1], [0], [0], [1], [0, 0, 1, 1], [], []>} : vector<1x64xbf16>, vector<64x64xbf16>, vector<1x64xf32> -> vector<1x64xf32>
    %130 = arith.addf %125, %129 : vector<1x64xf32>
    %131 = vector.extract_strided_slice %121 {offsets = [2, 0], sizes = [1, 64], strides = [1, 1]} : vector<4x64xbf16> to vector<1x64xbf16>
    %c2_47 = arith.constant 2 : index
    %c0_48 = arith.constant 0 : index
    %c0_49 = arith.constant 0 : index
    %132 = vector.load %arg3[%c2_47, %c0_48, %c0_49] : memref<4x64x64xbf16, #tpu.memory_space<vmem>>, vector<1x64x64xbf16>
    %133 = vector.shape_cast %132 : vector<1x64x64xbf16> to vector<64x64xbf16>
    %cst_50 = arith.constant dense<0.000000e+00> : vector<1x64xf32>
    %134 = tpu.matmul %131, %133, %cst_50 {dimension_numbers = #tpu.dot_dimension_numbers<[1], [0], [0], [1], [0, 0, 1, 1], [], []>} : vector<1x64xbf16>, vector<64x64xbf16>, vector<1x64xf32> -> vector<1x64xf32>
    %135 = arith.addf %130, %134 : vector<1x64xf32>
    %136 = vector.extract_strided_slice %121 {offsets = [3, 0], sizes = [1, 64], strides = [1, 1]} : vector<4x64xbf16> to vector<1x64xbf16>
    %c3_51 = arith.constant 3 : index
    %c0_52 = arith.constant 0 : index
    %c0_53 = arith.constant 0 : index
    %137 = vector.load %arg3[%c3_51, %c0_52, %c0_53] : memref<4x64x64xbf16, #tpu.memory_space<vmem>>, vector<1x64x64xbf16>
    %138 = vector.shape_cast %137 : vector<1x64x64xbf16> to vector<64x64xbf16>
    %cst_54 = arith.constant dense<0.000000e+00> : vector<1x64xf32>
    %139 = tpu.matmul %136, %138, %cst_54 {dimension_numbers = #tpu.dot_dimension_numbers<[1], [0], [0], [1], [0, 0, 1, 1], [], []>} : vector<1x64xbf16>, vector<64x64xbf16>, vector<1x64xf32> -> vector<1x64xf32>
    %140 = arith.addf %135, %139 : vector<1x64xf32>
    %c11 = arith.constant 11 : index
    %141 = memref.load %arg1[%c11] : memref<16xf32, #tpu.memory_space<smem>>
    %142 = vector.broadcast %141 : f32 to vector<1x64xf32>
    %143 = arith.addf %140, %142 : vector<1x64xf32>
    %144 = vector.broadcast %143 : vector<1x64xf32> to vector<8x64xf32>
    %145 = arith.mulf %54, %144 : vector<8x64xf32>
    %146 = arith.addf %145, %54 : vector<8x64xf32>
    %c8 = arith.constant 8 : index
    %147 = memref.load %arg1[%c8] : memref<16xf32, #tpu.memory_space<smem>>
    %148 = vector.broadcast %147 : f32 to vector<8x64xf32>
    %149 = arith.mulf %148, %146 : vector<8x64xf32>
    %c9 = arith.constant 9 : index
    %150 = memref.load %arg1[%c9] : memref<16xf32, #tpu.memory_space<smem>>
    %151 = vector.broadcast %150 : f32 to vector<8x64xf32>
    %152 = arith.mulf %151, %13 : vector<8x64xf32>
    %153 = arith.addf %149, %152 : vector<8x64xf32>
    %c10 = arith.constant 10 : index
    %154 = memref.load %arg1[%c10] : memref<16xf32, #tpu.memory_space<smem>>
    %155 = vector.broadcast %154 : f32 to vector<8x64xf32>
    %156 = arith.mulf %155, %120 : vector<8x64xf32>
    %157 = arith.addf %153, %156 : vector<8x64xf32>
    %158 = arith.addf %13, %157 : vector<8x64xf32>
    %cst_55 = arith.constant dense<0.000000e+00> : vector<64xf32>
    %159 = vector.multi_reduction <add>, %158, %cst_55 [0] : vector<8x64xf32> to vector<64xf32>
    %160 = vector.shape_cast %159 : vector<64xf32> to vector<1x64xf32>
    %cst_56 = arith.constant 8.000000e+00 : f32
    %161 = vector.broadcast %cst_56 : f32 to vector<1x64xf32>
    %162 = arith.divf %160, %161 : vector<1x64xf32>
    %163 = vector.broadcast %162 : vector<1x64xf32> to vector<8x64xf32>
    %164 = arith.subf %158, %163 : vector<8x64xf32>
    %165 = arith.mulf %164, %164 : vector<8x64xf32>
    %cst_57 = arith.constant dense<0.000000e+00> : vector<64xf32>
    %166 = vector.multi_reduction <add>, %165, %cst_57 [0] : vector<8x64xf32> to vector<64xf32>
    %167 = vector.shape_cast %166 : vector<64xf32> to vector<1x64xf32>
    %cst_58 = arith.constant 8.000000e+00 : f32
    %168 = vector.broadcast %cst_58 : f32 to vector<1x64xf32>
    %169 = arith.divf %167, %168 : vector<1x64xf32>
    %170 = vector.broadcast %162 : vector<1x64xf32> to vector<8x64xf32>
    %171 = arith.subf %158, %170 : vector<8x64xf32>
    %cst_59 = arith.constant 9.99999997E-7 : f32
    %172 = vector.broadcast %cst_59 : f32 to vector<1x64xf32>
    %173 = arith.addf %169, %172 : vector<1x64xf32>
    %174 = math.rsqrt %173 : vector<1x64xf32>
    %175 = vector.broadcast %174 : vector<1x64xf32> to vector<8x64xf32>
    %176 = arith.mulf %171, %175 : vector<8x64xf32>
    %177 = vector.broadcast %5 : vector<8x1xf32> to vector<8x64xf32>
    %178 = arith.mulf %176, %177 : vector<8x64xf32>
    %179 = vector.broadcast %6 : vector<8x1xf32> to vector<8x64xf32>
    %180 = arith.addf %178, %179 : vector<8x64xf32>
    %181 = arith.truncf %180 : vector<8x64xf32> to vector<8x64xbf16>
    %cst_60 = arith.constant dense<0.000000e+00> : vector<32x64xf32>
    %182 = tpu.matmul %1, %181, %cst_60 {dimension_numbers = #tpu.dot_dimension_numbers<[1], [0], [0], [1], [0, 0, 1, 1], [], []>} : vector<32x8xbf16>, vector<8x64xbf16>, vector<32x64xf32> -> vector<32x64xf32>
    %183 = vector.broadcast %3 : vector<32x1xf32> to vector<32x64xf32>
    %184 = arith.addf %182, %183 : vector<32x64xf32>
    %cst_61 = arith.constant 5.000000e-01 : f32
    %185 = vector.broadcast %cst_61 : f32 to vector<32x64xf32>
    %186 = arith.mulf %185, %184 : vector<32x64xf32>
    %cst_62 = arith.constant 4.471500e-02 : f32
    %187 = vector.broadcast %cst_62 : f32 to vector<32x64xf32>
    %188 = arith.mulf %187, %184 : vector<32x64xf32>
    %189 = arith.mulf %188, %184 : vector<32x64xf32>
    %190 = arith.mulf %189, %184 : vector<32x64xf32>
    %191 = arith.addf %184, %190 : vector<32x64xf32>
    %cst_63 = arith.constant 0.797884583 : f32
    %192 = vector.broadcast %cst_63 : f32 to vector<32x64xf32>
    %193 = arith.mulf %192, %191 : vector<32x64xf32>
    %194 = math.tanh %193 : vector<32x64xf32>
    %cst_64 = arith.constant 1.000000e+00 : f32
    %195 = vector.broadcast %cst_64 : f32 to vector<32x64xf32>
    %196 = arith.addf %195, %194 : vector<32x64xf32>
    %197 = arith.mulf %186, %196 : vector<32x64xf32>
    %198 = arith.truncf %197 : vector<32x64xf32> to vector<32x64xbf16>
    %cst_65 = arith.constant dense<0.000000e+00> : vector<8x64xf32>
    %199 = tpu.matmul %2, %198, %cst_65 {dimension_numbers = #tpu.dot_dimension_numbers<[1], [0], [0], [1], [0, 0, 1, 1], [], []>} : vector<8x32xbf16>, vector<32x64xbf16>, vector<8x64xf32> -> vector<8x64xf32>
    %200 = arith.addf %180, %199 : vector<8x64xf32>
    %201 = vector.broadcast %9 : vector<8x1xf32> to vector<8x64xf32>
    %202 = arith.addf %200, %201 : vector<8x64xf32>
    %cst_66 = arith.constant dense<0.000000e+00> : vector<64xf32>
    %203 = vector.multi_reduction <add>, %202, %cst_66 [0] : vector<8x64xf32> to vector<64xf32>
    %204 = vector.shape_cast %203 : vector<64xf32> to vector<1x64xf32>
    %cst_67 = arith.constant 8.000000e+00 : f32
    %205 = vector.broadcast %cst_67 : f32 to vector<1x64xf32>
    %206 = arith.divf %204, %205 : vector<1x64xf32>
    %207 = vector.broadcast %206 : vector<1x64xf32> to vector<8x64xf32>
    %208 = arith.subf %202, %207 : vector<8x64xf32>
    %209 = arith.mulf %208, %208 : vector<8x64xf32>
    %cst_68 = arith.constant dense<0.000000e+00> : vector<64xf32>
    %210 = vector.multi_reduction <add>, %209, %cst_68 [0] : vector<8x64xf32> to vector<64xf32>
    %211 = vector.shape_cast %210 : vector<64xf32> to vector<1x64xf32>
    %cst_69 = arith.constant 8.000000e+00 : f32
    %212 = vector.broadcast %cst_69 : f32 to vector<1x64xf32>
    %213 = arith.divf %211, %212 : vector<1x64xf32>
    %214 = vector.broadcast %206 : vector<1x64xf32> to vector<8x64xf32>
    %215 = arith.subf %202, %214 : vector<8x64xf32>
    %cst_70 = arith.constant 9.99999997E-7 : f32
    %216 = vector.broadcast %cst_70 : f32 to vector<1x64xf32>
    %217 = arith.addf %213, %216 : vector<1x64xf32>
    %218 = math.rsqrt %217 : vector<1x64xf32>
    %219 = vector.broadcast %218 : vector<1x64xf32> to vector<8x64xf32>
    %220 = arith.mulf %215, %219 : vector<8x64xf32>
    %221 = vector.broadcast %7 : vector<8x1xf32> to vector<8x64xf32>
    %222 = arith.mulf %220, %221 : vector<8x64xf32>
    %223 = vector.broadcast %8 : vector<8x1xf32> to vector<8x64xf32>
    %224 = arith.addf %222, %223 : vector<8x64xf32>
    %c1_71 = arith.constant 1 : index
    %c0_72 = arith.constant 0 : index
    %c0_73 = arith.constant 0 : index
    %225 = vector.load %arg0[%c1_71, %c0_72, %c0_73] : memref<2x8x64xf32, #tpu.memory_space<vmem>>, vector<1x8x64xf32>
    %226 = vector.shape_cast %225 : vector<1x8x64xf32> to vector<8x64xf32>
    %227 = arith.truncf %226 : vector<8x64xf32> to vector<8x64xbf16>
    %cst_74 = arith.constant dense<0.000000e+00> : vector<8xf32>
    %228 = vector.multi_reduction <add>, %226, %cst_74 [1] : vector<8x64xf32> to vector<8xf32>
    %229 = vector.shape_cast %228 : vector<8xf32> to vector<8x1xf32>
    %cst_75 = arith.constant 6.400000e+01 : f32
    %230 = vector.broadcast %cst_75 : f32 to vector<8x1xf32>
    %231 = arith.divf %229, %230 : vector<8x1xf32>
    %c1_i32_76 = arith.constant 1 : i32
    %232 = vector.broadcast %c1_i32_76 : i32 to vector<8x1xi32>
    %233 = arith.cmpi sge, %11, %232 : vector<8x1xi32>
    %234 = vector.extract_strided_slice %231 {offsets = [7, 0], sizes = [1, 1], strides = [1, 1]} : vector<8x1xf32> to vector<1x1xf32>
    %235 = vector.extract_strided_slice %231 {offsets = [0, 0], sizes = [7, 1], strides = [1, 1]} : vector<8x1xf32> to vector<7x1xf32>
    %236 = tpu.concatenate %234, %235 in 0 : vector<1x1xf32>, vector<7x1xf32> -> vector<8x1xf32>
    %cst_77 = arith.constant 0.000000e+00 : f32
    %237 = vector.broadcast %cst_77 : f32 to vector<8x1xf32>
    %238 = arith.select %233, %236, %237 : vector<8x1xi1>, vector<8x1xf32>
    %c6_i32_78 = arith.constant 6 : i32
    %239 = vector.broadcast %c6_i32_78 : i32 to vector<8x1xi32>
    %240 = arith.cmpi sle, %11, %239 : vector<8x1xi32>
    %241 = vector.extract_strided_slice %231 {offsets = [1, 0], sizes = [7, 1], strides = [1, 1]} : vector<8x1xf32> to vector<7x1xf32>
    %242 = vector.extract_strided_slice %231 {offsets = [0, 0], sizes = [1, 1], strides = [1, 1]} : vector<8x1xf32> to vector<1x1xf32>
    %243 = tpu.concatenate %241, %242 in 0 : vector<7x1xf32>, vector<1x1xf32> -> vector<8x1xf32>
    %cst_79 = arith.constant 0.000000e+00 : f32
    %244 = vector.broadcast %cst_79 : f32 to vector<8x1xf32>
    %245 = arith.select %240, %243, %244 : vector<8x1xi1>, vector<8x1xf32>
    %c0_80 = arith.constant 0 : index
    %246 = memref.load %arg1[%c0_80] : memref<16xf32, #tpu.memory_space<smem>>
    %247 = vector.broadcast %246 : f32 to vector<8x1xf32>
    %248 = arith.mulf %247, %238 : vector<8x1xf32>
    %c1_81 = arith.constant 1 : index
    %249 = memref.load %arg1[%c1_81] : memref<16xf32, #tpu.memory_space<smem>>
    %250 = vector.broadcast %249 : f32 to vector<8x1xf32>
    %251 = arith.mulf %250, %231 : vector<8x1xf32>
    %252 = arith.addf %248, %251 : vector<8x1xf32>
    %c2_82 = arith.constant 2 : index
    %253 = memref.load %arg1[%c2_82] : memref<16xf32, #tpu.memory_space<smem>>
    %254 = vector.broadcast %253 : f32 to vector<8x1xf32>
    %255 = arith.mulf %254, %245 : vector<8x1xf32>
    %256 = arith.addf %252, %255 : vector<8x1xf32>
    %c3_83 = arith.constant 3 : index
    %257 = memref.load %arg1[%c3_83] : memref<16xf32, #tpu.memory_space<smem>>
    %258 = vector.broadcast %257 : f32 to vector<8x1xf32>
    %259 = arith.addf %256, %258 : vector<8x1xf32>
    %260 = arith.negf %259 : vector<8x1xf32>
    %261 = math.exp %260 : vector<8x1xf32>
    %cst_84 = arith.constant 1.000000e+00 : f32
    %262 = vector.broadcast %cst_84 : f32 to vector<8x1xf32>
    %263 = arith.addf %262, %261 : vector<8x1xf32>
    %264 = arith.divf %262, %263 : vector<8x1xf32>
    %265 = vector.broadcast %264 : vector<8x1xf32> to vector<8x64xf32>
    %266 = arith.mulf %226, %265 : vector<8x64xf32>
    %267 = arith.addf %266, %226 : vector<8x64xf32>
    %c4_85 = arith.constant 4 : index
    %268 = memref.load %arg1[%c4_85] : memref<16xf32, #tpu.memory_space<smem>>
    %269 = vector.broadcast %268 : f32 to vector<8x1xf32>
    %270 = arith.mulf %269, %238 : vector<8x1xf32>
    %c5_86 = arith.constant 5 : index
    %271 = memref.load %arg1[%c5_86] : memref<16xf32, #tpu.memory_space<smem>>
    %272 = vector.broadcast %271 : f32 to vector<8x1xf32>
    %273 = arith.mulf %272, %231 : vector<8x1xf32>
    %274 = arith.addf %270, %273 : vector<8x1xf32>
    %c6_87 = arith.constant 6 : index
    %275 = memref.load %arg1[%c6_87] : memref<16xf32, #tpu.memory_space<smem>>
    %276 = vector.broadcast %275 : f32 to vector<8x1xf32>
    %277 = arith.mulf %276, %245 : vector<8x1xf32>
    %278 = arith.addf %274, %277 : vector<8x1xf32>
    %c7_88 = arith.constant 7 : index
    %279 = memref.load %arg1[%c7_88] : memref<16xf32, #tpu.memory_space<smem>>
    %280 = vector.broadcast %279 : f32 to vector<8x1xf32>
    %281 = arith.addf %278, %280 : vector<8x1xf32>
    %282 = arith.negf %281 : vector<8x1xf32>
    %283 = math.exp %282 : vector<8x1xf32>
    %cst_89 = arith.constant 1.000000e+00 : f32
    %284 = vector.broadcast %cst_89 : f32 to vector<8x1xf32>
    %285 = arith.addf %284, %283 : vector<8x1xf32>
    %286 = arith.divf %284, %285 : vector<8x1xf32>
    %cst_90 = arith.constant dense<0.000000e+00> : vector<8x8xf32>
    %287 = tpu.matmul %286, %286, %cst_90 {dimension_numbers = #tpu.dot_dimension_numbers<[1], [1], [0], [0], [0, 0, 1, 0], [], []>} : vector<8x1xf32>, vector<8x1xf32>, vector<8x8xf32> -> vector<8x8xf32>
    %288 = vector.shape_cast %287 : vector<8x8xf32> to vector<1x8x8xf32>
    %cst_91 = arith.constant dense<0xFF800000> : vector<1xf32>
    %289 = vector.multi_reduction <maximumf>, %288, %cst_91 [1, 2] : vector<1x8x8xf32> to vector<1xf32>
    %290 = vector.shape_cast %289 : vector<1xf32> to vector<1x1x1xf32>
    %291 = vector.extract %290[0, 0, 0] : f32 from vector<1x1x1xf32>
    %292 = vector.broadcast %291 : f32 to vector<8x8xf32>
    %293 = arith.subf %287, %292 : vector<8x8xf32>
    %294 = math.exp %293 : vector<8x8xf32>
    %295 = vector.shape_cast %294 : vector<8x8xf32> to vector<1x8x8xf32>
    %cst_92 = arith.constant dense<0.000000e+00> : vector<1xf32>
    %296 = vector.multi_reduction <add>, %295, %cst_92 [1, 2] : vector<1x8x8xf32> to vector<1xf32>
    %297 = vector.shape_cast %296 : vector<1xf32> to vector<1x1x1xf32>
    %298 = vector.extract %297[0, 0, 0] : f32 from vector<1x1x1xf32>
    %299 = vector.broadcast %298 : f32 to vector<8x8xf32>
    %300 = arith.divf %294, %299 : vector<8x8xf32>
    %301 = arith.truncf %300 : vector<8x8xf32> to vector<8x8xbf16>
    %cst_93 = arith.constant dense<0.000000e+00> : vector<8x64xf32>
    %302 = tpu.matmul %301, %227, %cst_93 {dimension_numbers = #tpu.dot_dimension_numbers<[1], [0], [0], [1], [0, 0, 1, 1], [], []>} : vector<8x8xbf16>, vector<8x64xbf16>, vector<8x64xf32> -> vector<8x64xf32>
    %303 = arith.mulf %226, %302 : vector<8x64xf32>
    %cst_94 = arith.constant dense<0.000000e+00> : vector<20x64xf32>
    %304 = tpu.matmul %0, %227, %cst_94 {dimension_numbers = #tpu.dot_dimension_numbers<[1], [0], [0], [1], [0, 0, 1, 1], [], []>} : vector<20x8xbf16>, vector<8x64xbf16>, vector<20x64xf32> -> vector<20x64xf32>
    %305 = vector.broadcast %10 : vector<20x1xf32> to vector<20x64xf32>
    %306 = arith.addf %304, %305 : vector<20x64xf32>
    %307 = vector.extract_strided_slice %306 {offsets = [0, 0], sizes = [4, 64], strides = [1, 1]} : vector<20x64xf32> to vector<4x64xf32>
    %308 = vector.extract_strided_slice %306 {offsets = [4, 0], sizes = [4, 64], strides = [1, 1]} : vector<20x64xf32> to vector<4x64xf32>
    %309 = vector.extract_strided_slice %306 {offsets = [8, 0], sizes = [4, 64], strides = [1, 1]} : vector<20x64xf32> to vector<4x64xf32>
    %310 = vector.extract_strided_slice %306 {offsets = [12, 0], sizes = [8, 64], strides = [1, 1]} : vector<20x64xf32> to vector<8x64xf32>
    %311 = arith.truncf %309 : vector<4x64xf32> to vector<4x64xbf16>
    %312 = arith.truncf %308 : vector<4x64xf32> to vector<4x64xbf16>
    %cst_95 = arith.constant dense<0.000000e+00> : vector<64x64xf32>
    %313 = tpu.matmul %311, %312, %cst_95 {dimension_numbers = #tpu.dot_dimension_numbers<[0], [0], [1], [1], [0, 1, 1, 1], [], []>} : vector<4x64xbf16>, vector<4x64xbf16>, vector<64x64xf32> -> vector<64x64xf32>
    %314 = vector.shape_cast %313 : vector<64x64xf32> to vector<1x64x64xf32>
    %cst_96 = arith.constant dense<0xFF800000> : vector<1xf32>
    %315 = vector.multi_reduction <maximumf>, %314, %cst_96 [1, 2] : vector<1x64x64xf32> to vector<1xf32>
    %316 = vector.shape_cast %315 : vector<1xf32> to vector<1x1x1xf32>
    %317 = vector.extract %316[0, 0, 0] : f32 from vector<1x1x1xf32>
    %318 = vector.broadcast %317 : f32 to vector<64x64xf32>
    %319 = arith.subf %313, %318 : vector<64x64xf32>
    %320 = math.exp %319 : vector<64x64xf32>
    %321 = vector.shape_cast %320 : vector<64x64xf32> to vector<1x64x64xf32>
    %cst_97 = arith.constant dense<0.000000e+00> : vector<1xf32>
    %322 = vector.multi_reduction <add>, %321, %cst_97 [1, 2] : vector<1x64x64xf32> to vector<1xf32>
    %323 = vector.shape_cast %322 : vector<1xf32> to vector<1x1x1xf32>
    %324 = vector.extract %323[0, 0, 0] : f32 from vector<1x1x1xf32>
    %325 = vector.broadcast %324 : f32 to vector<64x64xf32>
    %326 = arith.divf %320, %325 : vector<64x64xf32>
    %327 = arith.truncf %310 : vector<8x64xf32> to vector<8x64xbf16>
    %328 = arith.truncf %326 : vector<64x64xf32> to vector<64x64xbf16>
    %cst_98 = arith.constant dense<0.000000e+00> : vector<8x64xf32>
    %329 = tpu.matmul %327, %328, %cst_98 {dimension_numbers = #tpu.dot_dimension_numbers<[1], [0], [0], [1], [0, 0, 1, 1], [], []>} : vector<8x64xbf16>, vector<64x64xbf16>, vector<8x64xf32> -> vector<8x64xf32>
    %330 = vector.broadcast %4 : vector<8x1xf32> to vector<8x64xf32>
    %331 = arith.addf %329, %330 : vector<8x64xf32>
    %332 = arith.mulf %303, %331 : vector<8x64xf32>
    %333 = arith.addf %332, %303 : vector<8x64xf32>
    %334 = arith.truncf %307 : vector<4x64xf32> to vector<4x64xbf16>
    %335 = vector.extract_strided_slice %334 {offsets = [0, 0], sizes = [1, 64], strides = [1, 1]} : vector<4x64xbf16> to vector<1x64xbf16>
    %c0_99 = arith.constant 0 : index
    %c0_100 = arith.constant 0 : index
    %c0_101 = arith.constant 0 : index
    %336 = vector.load %arg3[%c0_99, %c0_100, %c0_101] : memref<4x64x64xbf16, #tpu.memory_space<vmem>>, vector<1x64x64xbf16>
    %337 = vector.shape_cast %336 : vector<1x64x64xbf16> to vector<64x64xbf16>
    %cst_102 = arith.constant dense<0.000000e+00> : vector<1x64xf32>
    %338 = tpu.matmul %335, %337, %cst_102 {dimension_numbers = #tpu.dot_dimension_numbers<[1], [0], [0], [1], [0, 0, 1, 1], [], []>} : vector<1x64xbf16>, vector<64x64xbf16>, vector<1x64xf32> -> vector<1x64xf32>
    %339 = vector.extract_strided_slice %334 {offsets = [1, 0], sizes = [1, 64], strides = [1, 1]} : vector<4x64xbf16> to vector<1x64xbf16>
    %c1_103 = arith.constant 1 : index
    %c0_104 = arith.constant 0 : index
    %c0_105 = arith.constant 0 : index
    %340 = vector.load %arg3[%c1_103, %c0_104, %c0_105] : memref<4x64x64xbf16, #tpu.memory_space<vmem>>, vector<1x64x64xbf16>
    %341 = vector.shape_cast %340 : vector<1x64x64xbf16> to vector<64x64xbf16>
    %cst_106 = arith.constant dense<0.000000e+00> : vector<1x64xf32>
    %342 = tpu.matmul %339, %341, %cst_106 {dimension_numbers = #tpu.dot_dimension_numbers<[1], [0], [0], [1], [0, 0, 1, 1], [], []>} : vector<1x64xbf16>, vector<64x64xbf16>, vector<1x64xf32> -> vector<1x64xf32>
    %343 = arith.addf %338, %342 : vector<1x64xf32>
    %344 = vector.extract_strided_slice %334 {offsets = [2, 0], sizes = [1, 64], strides = [1, 1]} : vector<4x64xbf16> to vector<1x64xbf16>
    %c2_107 = arith.constant 2 : index
    %c0_108 = arith.constant 0 : index
    %c0_109 = arith.constant 0 : index
    %345 = vector.load %arg3[%c2_107, %c0_108, %c0_109] : memref<4x64x64xbf16, #tpu.memory_space<vmem>>, vector<1x64x64xbf16>
    %346 = vector.shape_cast %345 : vector<1x64x64xbf16> to vector<64x64xbf16>
    %cst_110 = arith.constant dense<0.000000e+00> : vector<1x64xf32>
    %347 = tpu.matmul %344, %346, %cst_110 {dimension_numbers = #tpu.dot_dimension_numbers<[1], [0], [0], [1], [0, 0, 1, 1], [], []>} : vector<1x64xbf16>, vector<64x64xbf16>, vector<1x64xf32> -> vector<1x64xf32>
    %348 = arith.addf %343, %347 : vector<1x64xf32>
    %349 = vector.extract_strided_slice %334 {offsets = [3, 0], sizes = [1, 64], strides = [1, 1]} : vector<4x64xbf16> to vector<1x64xbf16>
    %c3_111 = arith.constant 3 : index
    %c0_112 = arith.constant 0 : index
    %c0_113 = arith.constant 0 : index
    %350 = vector.load %arg3[%c3_111, %c0_112, %c0_113] : memref<4x64x64xbf16, #tpu.memory_space<vmem>>, vector<1x64x64xbf16>
    %351 = vector.shape_cast %350 : vector<1x64x64xbf16> to vector<64x64xbf16>
    %cst_114 = arith.constant dense<0.000000e+00> : vector<1x64xf32>
    %352 = tpu.matmul %349, %351, %cst_114 {dimension_numbers = #tpu.dot_dimension_numbers<[1], [0], [0], [1], [0, 0, 1, 1], [], []>} : vector<1x64xbf16>, vector<64x64xbf16>, vector<1x64xf32> -> vector<1x64xf32>
    %353 = arith.addf %348, %352 : vector<1x64xf32>
    %c11_115 = arith.constant 11 : index
    %354 = memref.load %arg1[%c11_115] : memref<16xf32, #tpu.memory_space<smem>>
    %355 = vector.broadcast %354 : f32 to vector<1x64xf32>
    %356 = arith.addf %353, %355 : vector<1x64xf32>
    %357 = vector.broadcast %356 : vector<1x64xf32> to vector<8x64xf32>
    %358 = arith.mulf %267, %357 : vector<8x64xf32>
    %359 = arith.addf %358, %267 : vector<8x64xf32>
    %c8_116 = arith.constant 8 : index
    %360 = memref.load %arg1[%c8_116] : memref<16xf32, #tpu.memory_space<smem>>
    %361 = vector.broadcast %360 : f32 to vector<8x64xf32>
    %362 = arith.mulf %361, %359 : vector<8x64xf32>
    %c9_117 = arith.constant 9 : index
    %363 = memref.load %arg1[%c9_117] : memref<16xf32, #tpu.memory_space<smem>>
    %364 = vector.broadcast %363 : f32 to vector<8x64xf32>
    %365 = arith.mulf %364, %226 : vector<8x64xf32>
    %366 = arith.addf %362, %365 : vector<8x64xf32>
    %c10_118 = arith.constant 10 : index
    %367 = memref.load %arg1[%c10_118] : memref<16xf32, #tpu.memory_space<smem>>
    %368 = vector.broadcast %367 : f32 to vector<8x64xf32>
    %369 = arith.mulf %368, %333 : vector<8x64xf32>
    %370 = arith.addf %366, %369 : vector<8x64xf32>
    %371 = arith.addf %226, %370 : vector<8x64xf32>
    %cst_119 = arith.constant dense<0.000000e+00> : vector<64xf32>
    %372 = vector.multi_reduction <add>, %371, %cst_119 [0] : vector<8x64xf32> to vector<64xf32>
    %373 = vector.shape_cast %372 : vector<64xf32> to vector<1x64xf32>
    %cst_120 = arith.constant 8.000000e+00 : f32
    %374 = vector.broadcast %cst_120 : f32 to vector<1x64xf32>
    %375 = arith.divf %373, %374 : vector<1x64xf32>
    %376 = vector.broadcast %375 : vector<1x64xf32> to vector<8x64xf32>
    %377 = arith.subf %371, %376 : vector<8x64xf32>
    %378 = arith.mulf %377, %377 : vector<8x64xf32>
    %cst_121 = arith.constant dense<0.000000e+00> : vector<64xf32>
    %379 = vector.multi_reduction <add>, %378, %cst_121 [0] : vector<8x64xf32> to vector<64xf32>
    %380 = vector.shape_cast %379 : vector<64xf32> to vector<1x64xf32>
    %cst_122 = arith.constant 8.000000e+00 : f32
    %381 = vector.broadcast %cst_122 : f32 to vector<1x64xf32>
    %382 = arith.divf %380, %381 : vector<1x64xf32>
    %383 = vector.broadcast %375 : vector<1x64xf32> to vector<8x64xf32>
    %384 = arith.subf %371, %383 : vector<8x64xf32>
    %cst_123 = arith.constant 9.99999997E-7 : f32
    %385 = vector.broadcast %cst_123 : f32 to vector<1x64xf32>
    %386 = arith.addf %382, %385 : vector<1x64xf32>
    %387 = math.rsqrt %386 : vector<1x64xf32>
    %388 = vector.broadcast %387 : vector<1x64xf32> to vector<8x64xf32>
    %389 = arith.mulf %384, %388 : vector<8x64xf32>
    %390 = vector.broadcast %5 : vector<8x1xf32> to vector<8x64xf32>
    %391 = arith.mulf %389, %390 : vector<8x64xf32>
    %392 = vector.broadcast %6 : vector<8x1xf32> to vector<8x64xf32>
    %393 = arith.addf %391, %392 : vector<8x64xf32>
    %394 = arith.truncf %393 : vector<8x64xf32> to vector<8x64xbf16>
    %cst_124 = arith.constant dense<0.000000e+00> : vector<32x64xf32>
    %395 = tpu.matmul %1, %394, %cst_124 {dimension_numbers = #tpu.dot_dimension_numbers<[1], [0], [0], [1], [0, 0, 1, 1], [], []>} : vector<32x8xbf16>, vector<8x64xbf16>, vector<32x64xf32> -> vector<32x64xf32>
    %396 = vector.broadcast %3 : vector<32x1xf32> to vector<32x64xf32>
    %397 = arith.addf %395, %396 : vector<32x64xf32>
    %cst_125 = arith.constant 5.000000e-01 : f32
    %398 = vector.broadcast %cst_125 : f32 to vector<32x64xf32>
    %399 = arith.mulf %398, %397 : vector<32x64xf32>
    %cst_126 = arith.constant 4.471500e-02 : f32
    %400 = vector.broadcast %cst_126 : f32 to vector<32x64xf32>
    %401 = arith.mulf %400, %397 : vector<32x64xf32>
    %402 = arith.mulf %401, %397 : vector<32x64xf32>
    %403 = arith.mulf %402, %397 : vector<32x64xf32>
    %404 = arith.addf %397, %403 : vector<32x64xf32>
    %cst_127 = arith.constant 0.797884583 : f32
    %405 = vector.broadcast %cst_127 : f32 to vector<32x64xf32>
    %406 = arith.mulf %405, %404 : vector<32x64xf32>
    %407 = math.tanh %406 : vector<32x64xf32>
    %cst_128 = arith.constant 1.000000e+00 : f32
    %408 = vector.broadcast %cst_128 : f32 to vector<32x64xf32>
    %409 = arith.addf %408, %407 : vector<32x64xf32>
    %410 = arith.mulf %399, %409 : vector<32x64xf32>
    %411 = arith.truncf %410 : vector<32x64xf32> to vector<32x64xbf16>
    %cst_129 = arith.constant dense<0.000000e+00> : vector<8x64xf32>
    %412 = tpu.matmul %2, %411, %cst_129 {dimension_numbers = #tpu.dot_dimension_numbers<[1], [0], [0], [1], [0, 0, 1, 1], [], []>} : vector<8x32xbf16>, vector<32x64xbf16>, vector<8x64xf32> -> vector<8x64xf32>
    %413 = arith.addf %393, %412 : vector<8x64xf32>
    %414 = vector.broadcast %9 : vector<8x1xf32> to vector<8x64xf32>
    %415 = arith.addf %413, %414 : vector<8x64xf32>
    %cst_130 = arith.constant dense<0.000000e+00> : vector<64xf32>
    %416 = vector.multi_reduction <add>, %415, %cst_130 [0] : vector<8x64xf32> to vector<64xf32>
    %417 = vector.shape_cast %416 : vector<64xf32> to vector<1x64xf32>
    %cst_131 = arith.constant 8.000000e+00 : f32
    %418 = vector.broadcast %cst_131 : f32 to vector<1x64xf32>
    %419 = arith.divf %417, %418 : vector<1x64xf32>
    %420 = vector.broadcast %419 : vector<1x64xf32> to vector<8x64xf32>
    %421 = arith.subf %415, %420 : vector<8x64xf32>
    %422 = arith.mulf %421, %421 : vector<8x64xf32>
    %cst_132 = arith.constant dense<0.000000e+00> : vector<64xf32>
    %423 = vector.multi_reduction <add>, %422, %cst_132 [0] : vector<8x64xf32> to vector<64xf32>
    %424 = vector.shape_cast %423 : vector<64xf32> to vector<1x64xf32>
    %cst_133 = arith.constant 8.000000e+00 : f32
    %425 = vector.broadcast %cst_133 : f32 to vector<1x64xf32>
    %426 = arith.divf %424, %425 : vector<1x64xf32>
    %427 = vector.broadcast %419 : vector<1x64xf32> to vector<8x64xf32>
    %428 = arith.subf %415, %427 : vector<8x64xf32>
    %cst_134 = arith.constant 9.99999997E-7 : f32
    %429 = vector.broadcast %cst_134 : f32 to vector<1x64xf32>
    %430 = arith.addf %426, %429 : vector<1x64xf32>
    %431 = math.rsqrt %430 : vector<1x64xf32>
    %432 = vector.broadcast %431 : vector<1x64xf32> to vector<8x64xf32>
    %433 = arith.mulf %428, %432 : vector<8x64xf32>
    %434 = vector.broadcast %7 : vector<8x1xf32> to vector<8x64xf32>
    %435 = arith.mulf %433, %434 : vector<8x64xf32>
    %436 = vector.broadcast %8 : vector<8x1xf32> to vector<8x64xf32>
    %437 = arith.addf %435, %436 : vector<8x64xf32>
    %438 = tpu.concatenate %224, %437 in 1 : vector<8x64xf32>, vector<8x64xf32> -> vector<8x128xf32>
    %c0_135 = arith.constant 0 : index
    %c0_136 = arith.constant 0 : index
    %439 = vector.load %arg7[%c0_135, %c0_136] : memref<8x128xf32, #tpu.memory_space<vmem>>, vector<8x128xf32>
    tpu.vector_store %arg7[%c0_135, %c0_136], %438 {strides = array<i32>} : memref<8x128xf32, #tpu.memory_space<vmem>>, vector<8x128xf32>,
    return
  }
}

</mosaic_0001>

<llo_original>
// kernel: glam_block_forward.1
$region0: #{glam_block_forward.1}
  #allocation0 [shape = 'u32[]', space=smem, size = 0x4, offset = 0x4, fixed_abs, tag = 'smem constant byte address 0x4 - core index']
  #allocation1 [shape = 'u32[72,128]{1,0:T(1,128)}', space=vmem, size = 0x9000, scoped, tag = 'internal scratch']
  %s0 = inlined_call_operand.vmem [shape: f32[2,8,64], index: 0, kind: input, shape index: {}]
  %s1 = inlined_call_operand.vmem [shape: f32[16], index: 1, kind: input, shape index: {}]
  %s2 = inlined_call_operand.vmem [shape: bf16[20,8], index: 2, kind: input, shape index: {}]
  %s3 = inlined_call_operand.vmem [shape: bf16[4,64,64], index: 3, kind: input, shape index: {}]
  %s4 = inlined_call_operand.vmem [shape: f32[32,8], index: 4, kind: input, shape index: {}]
  %s5 = inlined_call_operand.vmem [shape: bf16[32,8], index: 5, kind: input, shape index: {}]
  %s6 = inlined_call_operand.vmem [shape: bf16[8,32], index: 6, kind: input, shape index: {}]
  %s7 = inlined_call_operand.vmem [shape: f32[8,128], index: 7, kind: output, shape index: {}]
  %s8 = sld [smem:[#allocation0]]
  $region42: #{glam_block_forward.1} parent=0
    _
  %s10 = ssub.s32 1, %s8
  %s11 = scalar_select 0, %s10, %s8
  $region1: #{glam_block_forward.1} parent=0
    #allocation2 [shape = 'u8[512]{0}', space=smem, size = 0x200, scoped, tag = 'input window, operand 1, single buffered']
    #allocation3 [shape = 's32[1]{0}', space=sflag, size = 0x4, scoped, tag = 'scoped memory for glam_block_forward.1']
    %12 = vsyncpa [#allocation3], 0
    // Predicated region
    $region2: #{glam_block_forward.1} parent=1 // pred_check
      _
    $region3: #{glam_block_forward.1} parent=1 // pred_check_branch
      %14 = sbr.rel (0) target = $region5
    $region4: #{glam_block_forward.1} parent=1 // pred_region
      _
    $region5: #{glam_block_forward.1} parent=1 // pred_fallthru
      _
    // Predicated region
    $region6: #{glam_block_forward.1} parent=1 // pred_check
      _
    $region7: #{glam_block_forward.1} parent=1 // pred_check_branch
      %16 = sbr.rel (0) target = $region9
    $region8: #{glam_block_forward.1} parent=1 // pred_region
      %18 = vsyncadd [#allocation3], 0
      %s20 = sshll.u32 %s1, 4
      %s21 = int_to_ptr.vmem [resolvable:$true] %s20
      %23 = dma.vmem_to_smem %s21, 16, [#allocation2], [#allocation3]
    $region9: #{glam_block_forward.1} parent=1 // pred_fallthru
      _
    // Predicated region
    $region10: #{glam_block_forward.1} parent=1 // pred_check
      _
    $region11: #{glam_block_forward.1} parent=1 // pred_check_branch
      %25 = sbr.rel (0) target = $region13
    $region12: #{glam_block_forward.1} parent=1 // pred_region
      _
    $region13: #{glam_block_forward.1} parent=1 // pred_fallthru
      _
    // Predicated region
    $region14: #{glam_block_forward.1} parent=1 // pred_check
      _
    $region15: #{glam_block_forward.1} parent=1 // pred_check_branch
      %27 = sbr.rel (0) target = $region17
    $region16: #{glam_block_forward.1} parent=1 // pred_region
      _
    $region17: #{glam_block_forward.1} parent=1 // pred_fallthru
      _
    // Predicated region
    $region18: #{glam_block_forward.1} parent=1 // pred_check
      _
    $region19: #{glam_block_forward.1} parent=1 // pred_check_branch
      %29 = sbr.rel (0) target = $region21
    $region20: #{glam_block_forward.1} parent=1 // pred_region
      _
    $region21: #{glam_block_forward.1} parent=1 // pred_fallthru
      _
    // Predicated region
    $region22: #{glam_block_forward.1} parent=1 // pred_check
      _
    $region23: #{glam_block_forward.1} parent=1 // pred_check_branch
      %31 = sbr.rel (0) target = $region25
    $region24: #{glam_block_forward.1} parent=1 // pred_region
      _
    $region25: #{glam_block_forward.1} parent=1 // pred_fallthru
      _
    // Predicated region
    $region26: #{glam_block_forward.1} parent=1 // pred_check
      _
    $region27: #{glam_block_forward.1} parent=1 // pred_check_branch
      %33 = sbr.rel (0) target = $region29
    $region28: #{glam_block_forward.1} parent=1 // pred_region
      _
    $region29: #{glam_block_forward.1} parent=1 // pred_fallthru
      _
    // Predicated region
    $region30: #{glam_block_forward.1} parent=1 // pred_check
      _
    $region31: #{glam_block_forward.1} parent=1 // pred_check_branch
      %35 = sbr.rel (0) target = $region33
    $region32: #{glam_block_forward.1} parent=1 // pred_region
      %37 = dma.done [#allocation3], 16
    $region33: #{glam_block_forward.1} parent=1 // pred_fallthru
      _
    %38 = sfence
    %v40 = vld [vmem:[%s2] sm:$0xf]
    %v41 = vld [vmem:[%s2 + $0x4] sm:$0xf]
    %v42 = vld [vmem:[%s2 + $0x8] sm:$0x3]
    %v43 = vld [vmem:[%s5] sm:$0xf]
    %v44 = vld [vmem:[%s5 + $0x4] sm:$0xf]
    %v45 = vld [vmem:[%s5 + $0x8] sm:$0xf]
    %v46 = vld [vmem:[%s5 + $0xc] sm:$0xf]
    %v47 = vld [vmem:[%s6] sm:$0xf]
    %v48 = vld [vmem:[%s4] sm:$0xff]
    %v49 = vld [vmem:[%s4 + $0x8] sm:$0xff]
    %v50 = vld [vmem:[%s4 + $0x10] sm:$0xff]
    %v51 = vld [vmem:[%s4 + $0x18] sm:$0xff]
    %v52 = vld [vmem:[%s4 + $0x10] sm:$0xf]
    %v53 = vlaneseq
    %v54 = vshrl.u32 %v53, 7
    %v55 = vld [vmem:[%s0] sm:$0xff]
    %v56 = vpack.c.bf16 %v55, %v55
    %vm57 = vcmask 523264
    %v58 = vsel %vm57, %v55, 0.0
    %59 = vadd.xlane.f32.xlu0 %v58
    %v60 = vpop.xlane.xlu0 %59
    %v61 = vrcp.pop 64.0
    %v62 = vmul.f32 64.0, %v61
    %v63 = vsub.f32 1.0, %v62
    %v64 = vmul.f32 %v61, %v63
    %v65 = vadd.f32 %v61, %v64
    %vm66 = vweird.f32 %v61
    %v67 = vsel %vm66, %v61, %v65
    %v68 = vmul.f32 %v60, %v67
    %vm69 = vcmp.ge.s32.totalorder %v54, 1
    %v71 = vrot.slane %v68, 7
    %vm73 = vcmask 1040384
    %v74 = vsel %vm73, %v71, %v71
    %v75 = vsel %vm69, %v74, 0.0
    %vm76 = vcmp.le.s32.totalorder %v54, 6
    %v77 = vrot.slane %v68, 1
    %vm79 = vcmask 1046528
    %v80 = vsel %vm79, %v77, %v77
    %v81 = vsel %vm76, %v80, 0.0
    %s82 = sld [smem:[#allocation2]]
    %v83 = vstv %s82
    %v84 = vmul.f32 %v83, %v75
    %s85 = sld [smem:[#allocation2 + $0x1]]
    %v86 = vstv %s85
    %v87 = vmul.f32 %v86, %v68
    %v88 = vadd.f32 %v84, %v87
    %s89 = sld [smem:[#allocation2 + $0x2]]
    %v90 = vstv %s89
    %v91 = vmul.f32 %v90, %v81
    %v92 = vadd.f32 %v88, %v91
    %s93 = sld [smem:[#allocation2 + $0x3]]
    %v94 = vstv %s93
    %v95 = vadd.f32 %v92, %v94
    %v96 = vxor.u32 %v95, 2147483648
    %v97 = vmul.f32 %v96, 1.442695
    %v98 = vpow.pop %v97
    %v99 = vadd.f32 %v98, 1.0
    %v100 = vrcp.pop %v99
    %v101 = vmul.f32 %v99, %v100
    %v102 = vsub.f32 1.0, %v101
    %v103 = vmul.f32 %v100, %v102
    %v104 = vadd.f32 %v100, %v103
    %vm105 = vweird.f32 %v99
    %vm106 = vweird.f32 %v100
    %vm107 = vmor %vm105, %vm106
    %v108 = vsel %vm107, %v100, %v104
    %v109 = vand.u32 2147483647, %v99
    %vm110 = vcmp.eq.f32.partialorder %v109, 8.507059e+37
    %v111 = vand.u32 %v99, 2147483648
    %v112 = vor.u32 1.1754944e-38, %v111
    %v113 = vsel %vm110, %v112, %v108
    %v114 = vmul.f32 1.0, %v113
    %116 = vset.pattern.permute.xlu0 0
    %117 = vperm.xlu0 %116, %v114
    %v118 = vpop.permute.xlu0 %117
    %v120 = vmul.f32 %v55, %v118
    %v121 = vadd.f32 %v120, %v55
    %s122 = sld [smem:[#allocation2 + $0x4]]
    %v123 = vstv %s122
    %v124 = vmul.f32 %v123, %v75
    %s125 = sld [smem:[#allocation2 + $0x5]]
    %v126 = vstv %s125
    %v127 = vmul.f32 %v126, %v68
    %v128 = vadd.f32 %v124, %v127
    %s129 = sld [smem:[#allocation2 + $0x6]]
    %v130 = vstv %s129
    %v131 = vmul.f32 %v130, %v81
    %v132 = vadd.f32 %v128, %v131
    %s133 = sld [smem:[#allocation2 + $0x7]]
    %v134 = vstv %s133
    %v135 = vadd.f32 %v132, %v134
    %v136 = vxor.u32 %v135, 2147483648
    %v137 = vmul.f32 %v136, 1.442695
    %v138 = vpow.pop %v137
    %v139 = vadd.f32 %v138, 1.0
    %v140 = vrcp.pop %v139
    %v141 = vmul.f32 %v139, %v140
    %v142 = vsub.f32 1.0, %v141
    %v143 = vmul.f32 %v140, %v142
    %v144 = vadd.f32 %v140, %v143
    %vm145 = vweird.f32 %v139
    %vm146 = vweird.f32 %v140
    %vm147 = vmor %vm145, %vm146
    %v148 = vsel %vm147, %v140, %v144
    %v149 = vand.u32 2147483647, %v139
    %vm150 = vcmp.eq.f32.partialorder %v149, 8.507059e+37
    %v151 = vand.u32 %v139, 2147483648
    %v152 = vor.u32 1.1754944e-38, %v151
    %v153 = vsel %vm150, %v152, %v148
    %v154 = vmul.f32 1.0, %v153
    %vm155 = vcmask 7168
    %v157 = vsel %vm155, %v154, 0
    %159 = vmatpush.xpose.msra.mxu0 0.0
    %160 = vmatpush.xpose.msra.mxu0 0.0
    %161 = vmatpush.xpose.msra.mxu0 0.0
    %162 = vmatpush.xpose.msra.mxu0 0.0
    %163 = vmatpush.xpose.msra.mxu0 0.0
    %164 = vmatpush.xpose.msra.mxu0 0.0
    %165 = vmatpush.xpose.msra.mxu0 0.0
    %166 = vmatpush.xpose.msra.mxu0 0.0
    %167 = vmatpush.xpose.msra.mxu0 0.0
    %168 = vmatpush.xpose.msra.mxu0 0.0
    %169 = vmatpush.xpose.msra.mxu0 0.0
    %170 = vmatpush.xpose.msra.mxu0 0.0
    %171 = vmatpush.xpose.msra.mxu0 0.0
    %172 = vmatpush.xpose.msra.mxu0 0.0
    %173 = vmatpush.xpose.msra.mxu0 0.0
    %174 = vmatpush.xpose.msra.mxu0 %v157
    %175 = vmatmul.f32.gmra.mxu0 %v157
    %v176 = vpop.f32.mrf.mxu0
    %v177 = vadd.f32 0.0, %v176
    %178 = vdwg.mxu0
    %vm179 = vcmask 64512
    %v180 = vsel %vm179, %v177, -inf
    %181 = vmax.xlane.f32.xlu0 %v180
    %v182 = vpop.xlane.xlu0 %181
    %v183 = vrot.slane %v182, 4
    %v184 = vmax.f32 %v182, %v183
    %v185 = vrot.slane %v184, 2
    %v186 = vmax.f32 %v184, %v185
    %v187 = vrot.slane %v186, 1
    %v188 = vmax.f32 %v186, %v187
    %s189 = vtos %v188
    %v190 = vstv %s189
    %v191 = vsub.f32 %v177, %v190
    %v192 = vmul.f32 %v191, 1.442695
    %v193 = vpow.pop %v192
    %v194 = vsel %vm179, %v193, 0.0
    %195 = vadd.xlane.f32.xlu0 %v194
    %v196 = vpop.xlane.xlu0 %195
    %v197 = vrot.slane %v196, 4
    %v198 = vadd.f32 %v196, %v197
    %v199 = vrot.slane %v198, 2
    %v200 = vadd.f32 %v198, %v199
    %v201 = vrot.slane %v200, 1
    %v202 = vadd.f32 %v200, %v201
    %s203 = vtos %v202
    %v204 = vstv %s203
    %v205 = vrcp.pop %v204
    %v206 = vmul.f32 %v204, %v205
    %v207 = vsub.f32 1.0, %v206
    %v208 = vmul.f32 %v205, %v207
    %v209 = vadd.f32 %v205, %v208
    %vm210 = vweird.f32 %v204
    %vm211 = vweird.f32 %v205
    %vm212 = vmor %vm210, %vm211
    %v213 = vsel %vm212, %v205, %v209
    %v214 = vand.u32 2147483647, %v204
    %vm215 = vcmp.eq.f32.partialorder %v214, 8.507059e+37
    %v216 = vand.u32 %v204, 2147483648
    %v217 = vor.u32 1.1754944e-38, %v216
    %v218 = vsel %vm215, %v217, %v213
    %v219 = vmul.f32 %v193, %v218
    %v220 = vpack.c.bf16 %v219, %v219
    %v222 = vsel %vm179, %v220, 0
    %vm224 = vcmask 1043456
    %v226 = vsel %vm224, %v56, 0
    %228 = vmatpush.bf16.msra.mxu0 0
    %229 = vmatpush.bf16.msra.mxu0 0
    %230 = vmatpush.bf16.msra.mxu0 0
    %231 = vmatpush.bf16.msra.mxu0 0
    %232 = vmatpush.bf16.msra.mxu0 0
    %233 = vmatpush.bf16.msra.mxu0 0
    %234 = vmatpush.bf16.msra.mxu0 0
    %235 = vmatpush.bf16.msra.mxu0 %v226
    %236 = vmatmul.bf16.gmra.mxu0 %v222
    %v237 = vpop.f32.mrf.mxu0
    %v238 = vadd.f32 0.0, %v237
    %v239 = vpop.f32.mrf.mxu0
    %240 = vdwg.mxu0
    %v241 = vmul.f32 %v55, %v238
    %243 = vset.pattern.permute.xlu0 7
    %244 = vperm.xlu0 %243, %v48
    %v245 = vpop.permute.xlu0 %244
    %248 = vset.pattern.permute.xlu0 7
    %249 = vperm.xlu0 %248, %v49
    %v250 = vpop.permute.xlu0 %249
    %253 = vset.pattern.permute.xlu0 7
    %254 = vperm.xlu0 %253, %v52
    %v255 = vpop.permute.xlu0 %254
    %v260 = vunpack.c.l.b16 %v40
    %v261 = vunpack.c.l.b16 %v41
    %v262 = vunpack.c.l.b16 %v42
    %v263 = vpack.c.b16 %v261, %v260
    %v264 = vpack.c.b16 %v262, %v262
    %v266 = vsel %vm179, %v263, 0
    %v269 = vsel %vm179, %v264, 0
    %271 = vmatpush.bf16.msra.mxu0 0
    %272 = vmatpush.bf16.msra.mxu0 0
    %273 = vmatpush.bf16.msra.mxu0 0
    %274 = vmatpush.bf16.msra.mxu0 0
    %275 = vmatpush.bf16.msra.mxu0 0
    %276 = vmatpush.bf16.msra.mxu0 0
    %277 = vmatpush.bf16.msra.mxu0 0
    %278 = vmatpush.bf16.msra.mxu0 %v226
    %279 = vmatmul.bf16.gmra.mxu0 %v266
    %v280 = vpop.f32.mrf.mxu0
    %v281 = vadd.f32 %v245, %v280
    %v282 = vpop.f32.mrf.mxu0
    %v283 = vadd.f32 %v250, %v282
    %284 = vmatmul.bf16.gmra.mxu0 %v269
    %v285 = vpop.f32.mrf.mxu0
    %v286 = vadd.f32 %v255, %v285
    %v287 = vpop.f32.mrf.mxu0
    %288 = vdwg.mxu0
    %v289 = vpack.c.bf16 %v283, %v283
    %v290 = vpack.c.bf16 %v281, %v281
    %291 = vxpose.xlu0.c.b16.start [1/8] %v289, 128
    %292 = vxpose.xlu0.c.b16.cont [2/8] 0, 128
    %293 = vxpose.xlu0.c.b16.cont [3/8] 0, 128
    %294 = vxpose.xlu0.c.b16.cont [4/8] 0, 128
    %295 = vxpose.xlu0.c.b16.cont [5/8] 0, 128
    %296 = vxpose.xlu0.c.b16.cont [6/8] 0, 128
    %297 = vxpose.xlu0.c.b16.cont [7/8] 0, 128
    %298 = vxpose.xlu0.c.b16.end [8/8] 0, 128
    %v299 = vpop.trf.xlu0
    %v300 = vpop.trf.xlu0
    %v301 = vpop.trf.xlu0
    %v302 = vpop.trf.xlu0
    %v303 = vpop.trf.xlu0
    %v304 = vpop.trf.xlu0
    %v305 = vpop.trf.xlu0
    %v306 = vpop.trf.xlu0
    %v308 = vrot.slane %v290, 2
    %vm309 = vcmask 31744
    %v311 = vsel %vm309, %v299, 0
    %v314 = vsel %vm309, %v300, 0
    %v317 = vsel %vm309, %v301, 0
    %v320 = vsel %vm309, %v302, 0
    %vm322 = vcmask 1041408
    %v324 = vsel %vm322, %v308, 0
    %326 = vmatpush.bf16.msra.mxu0 0
    %327 = vmatpush.bf16.msra.mxu0 0
    %328 = vmatpush.bf16.msra.mxu0 0
    %329 = vmatpush.bf16.msra.mxu0 0
    %330 = vmatpush.bf16.msra.mxu0 0
    %331 = vmatpush.bf16.msra.mxu0 0
    %332 = vmatpush.bf16.msra.mxu0 0
    %333 = vmatpush.bf16.msra.mxu0 %v324
    %334 = vmatmul.bf16.gmra.mxu0 %v311
    %v335 = vpop.f32.mrf.mxu0
    %v336 = vadd.f32 0.0, %v335
    %v337 = vpop.f32.mrf.mxu0
    %v338 = vadd.f32 0.0, %v337
    %339 = vmatmul.bf16.gmra.mxu0 %v314
    %v340 = vpop.f32.mrf.mxu0
    %v341 = vadd.f32 0.0, %v340
    %v342 = vpop.f32.mrf.mxu0
    %v343 = vadd.f32 0.0, %v342
    %344 = vmatmul.bf16.gmra.mxu0 %v317
    %v345 = vpop.f32.mrf.mxu0
    %v346 = vadd.f32 0.0, %v345
    %v347 = vpop.f32.mrf.mxu0
    %v348 = vadd.f32 0.0, %v347
    %349 = vmatmul.bf16.gmra.mxu0 %v320
    %v350 = vpop.f32.mrf.mxu0
    %v351 = vadd.f32 0.0, %v350
    %v352 = vpop.f32.mrf.mxu0
    %v353 = vadd.f32 0.0, %v352
    %354 = vdwg.mxu0
    %v355 = vsel %vm57, %v336, -inf
    %v356 = vsel %vm57, %v338, -inf
    %v357 = vsel %vm57, %v341, -inf
    %v358 = vsel %vm57, %v343, -inf
    %v359 = vsel %vm57, %v346, -inf
    %v360 = vmax.f32 %v355, %v359
    %v361 = vsel %vm57, %v348, -inf
    %v362 = vmax.f32 %v356, %v361
    %v363 = vsel %vm57, %v351, -inf
    %v364 = vmax.f32 %v357, %v363
    %v365 = vsel %vm57, %v353, -inf
    %v366 = vmax.f32 %v358, %v365
    %v367 = vmax.f32 %v360, %v362
    %v368 = vmax.f32 %v364, %v366
    %v369 = vmax.f32 %v367, %v368
    %370 = vmax.xlane.f32.xlu0 %v369
    %v371 = vpop.xlane.xlu0 %370
    %v372 = vrot.slane %v371, 4
    %v373 = vmax.f32 %v371, %v372
    %v374 = vrot.slane %v373, 2
    %v375 = vmax.f32 %v373, %v374
    %v376 = vrot.slane %v375, 1
    %v377 = vmax.f32 %v375, %v376
    %s378 = vtos %v377
    %v379 = vstv %s378
    %v380 = vsub.f32 %v336, %v379
    %v381 = vsub.f32 %v338, %v379
    %v382 = vsub.f32 %v341, %v379
    %v383 = vsub.f32 %v343, %v379
    %v384 = vsub.f32 %v346, %v379
    %v385 = vsub.f32 %v348, %v379
    %v386 = vsub.f32 %v351, %v379
    %v387 = vsub.f32 %v353, %v379
    %v388 = vmul.f32 %v380, 1.442695
    %v389 = vpow.pop %v388
    %v390 = vmul.f32 %v381, 1.442695
    %v391 = vpow.pop %v390
    %v392 = vmul.f32 %v382, 1.442695
    %v393 = vpow.pop %v392
    %v394 = vmul.f32 %v383, 1.442695
    %v395 = vpow.pop %v394
    %v396 = vmul.f32 %v384, 1.442695
    %v397 = vpow.pop %v396
    %v398 = vmul.f32 %v385, 1.442695
    %v399 = vpow.pop %v398
    %v400 = vmul.f32 %v386, 1.442695
    %v401 = vpow.pop %v400
    %v402 = vmul.f32 %v387, 1.442695
    %v403 = vpow.pop %v402
    %v404 = vsel %vm57, %v389, 0.0
    %v405 = vsel %vm57, %v391, 0.0
    %v406 = vadd.f32 %v404, %v405
    %v407 = vsel %vm57, %v393, 0.0
    %v408 = vadd.f32 %v406, %v407
    %v409 = vsel %vm57, %v395, 0.0
    %v410 = vadd.f32 %v408, %v409
    %v411 = vsel %vm57, %v397, 0.0
    %v412 = vadd.f32 %v410, %v411
    %v413 = vsel %vm57, %v399, 0.0
    %v414 = vadd.f32 %v412, %v413
    %v415 = vsel %vm57, %v401, 0.0
    %v416 = vadd.f32 %v414, %v415
    %v417 = vsel %vm57, %v403, 0.0
    %v418 = vadd.f32 %v416, %v417
    %419 = vadd.xlane.f32.xlu0 %v418
    %v420 = vpop.xlane.xlu0 %419
    %v421 = vrot.slane %v420, 4
    %v422 = vadd.f32 %v420, %v421
    %v423 = vrot.slane %v422, 2
    %v424 = vadd.f32 %v422, %v423
    %v425 = vrot.slane %v424, 1
    %v426 = vadd.f32 %v424, %v425
    %s427 = vtos %v426
    %v428 = vstv %s427
    %v429 = vrcp.pop %v428
    %v430 = vmul.f32 %v428, %v429
    %v431 = vsub.f32 1.0, %v430
    %v432 = vmul.f32 %v429, %v431
    %v433 = vadd.f32 %v429, %v432
    %vm434 = vweird.f32 %v428
    %vm435 = vweird.f32 %v429
    %vm436 = vmor %vm434, %vm435
    %v437 = vsel %vm436, %v429, %v433
    %v438 = vand.u32 2147483647, %v428
    %vm439 = vcmp.eq.f32.partialorder %v438, 8.507059e+37
    %v440 = vand.u32 %v428, 2147483648
    %v441 = vor.u32 1.1754944e-38, %v440
    %v442 = vsel %vm439, %v441, %v437
    %v443 = vmul.f32 %v389, %v442
    %v444 = vmul.f32 %v391, %v442
    %v445 = vmul.f32 %v393, %v442
    %v446 = vmul.f32 %v395, %v442
    %v447 = vmul.f32 %v397, %v442
    %v448 = vmul.f32 %v399, %v442
    %v449 = vmul.f32 %v401, %v442
    %v450 = vmul.f32 %v403, %v442
    %v451 = vpack.c.bf16 %v286, %v283
    %v452 = vpack.c.bf16 %v444, %v443
    %v453 = vpack.c.bf16 %v446, %v445
    %v454 = vpack.c.bf16 %v448, %v447
    %v455 = vpack.c.bf16 %v450, %v449
    %456 = vset.pattern.permute.xlu0 1
    %457 = vperm.xlu0 %456, %v48
    %v458 = vpop.permute.xlu0 %457
    %v461 = vrot.slane %v451, 2
    %v463 = vsel %vm57, %v461, 0
    %465 = vmatpush.bf16.msra.mxu0 0
    %466 = vmatpush.bf16.msra.mxu0 0
    %467 = vmatpush.bf16.msra.mxu0 0
    %468 = vmatpush.bf16.msra.mxu0 0
    %469 = vmatpush.bf16.msra.mxu0 %v455
    %470 = vmatpush.bf16.msra.mxu0 %v454
    %471 = vmatpush.bf16.msra.mxu0 %v453
    %472 = vmatpush.bf16.msra.mxu0 %v452
    %473 = vmatmul.bf16.gmra.mxu0 %v463
    %v474 = vpop.f32.mrf.mxu0
    %v475 = vadd.f32 %v458, %v474
    %v476 = vpop.f32.mrf.mxu0
    %477 = vdwg.mxu0
    %v478 = vmul.f32 %v241, %v475
    %v479 = vadd.f32 %v478, %v241
    %v480 = vld [vmem:[%s3] sm:$0xf]
    %v481 = vld [vmem:[%s3 + $0x4] sm:$0xf]
    %v482 = vld [vmem:[%s3 + $0x8] sm:$0xf]
    %v483 = vld [vmem:[%s3 + $0xc] sm:$0xf]
    %v484 = vld [vmem:[%s3 + $0x10] sm:$0xf]
    %v485 = vld [vmem:[%s3 + $0x14] sm:$0xf]
    %v486 = vld [vmem:[%s3 + $0x18] sm:$0xf]
    %v487 = vld [vmem:[%s3 + $0x1c] sm:$0xf]
    %s488 = scalar_lea.vmem %s3, 32
    %v489 = vld [vmem:[%s488] sm:$0xf]
    %v490 = vld [vmem:[%s488 + $0x4] sm:$0xf]
    %v491 = vld [vmem:[%s488 + $0x8] sm:$0xf]
    %v492 = vld [vmem:[%s488 + $0xc] sm:$0xf]
    %v493 = vld [vmem:[%s488 + $0x10] sm:$0xf]
    %v494 = vld [vmem:[%s488 + $0x14] sm:$0xf]
    %v495 = vld [vmem:[%s488 + $0x18] sm:$0xf]
    %v496 = vld [vmem:[%s488 + $0x1c] sm:$0xf]
    %v497 = vunpack.c.l.b16 %v290
    %v498 = vpack.c.b16 %v497, %v497
    %v500 = vshrl.u32 %v498, 16
    %v510 = vunpack.c.l.b16 %v489
    %v511 = vunpack.c.l.b16 %v490
    %v512 = vunpack.c.l.b16 %v491
    %v513 = vunpack.c.l.b16 %v492
    %v514 = vunpack.c.l.b16 %v493
    %v515 = vunpack.c.l.b16 %v494
    %v516 = vunpack.c.l.b16 %v495
    %v517 = vunpack.c.l.b16 %v496
    %v518 = vpack.c.b16 %v511, %v510
    %v519 = vpack.c.b16 %v513, %v512
    %v520 = vpack.c.b16 %v515, %v514
    %v521 = vpack.c.b16 %v517, %v516
    %v527 = vsel %vm57, %v500, 0
    %529 = vmatpush.bf16.msra.mxu0 0
    %530 = vmatpush.bf16.msra.mxu0 0
    %531 = vmatpush.bf16.msra.mxu0 0
    %532 = vmatpush.bf16.msra.mxu0 0
    %533 = vmatpush.bf16.msra.mxu0 %v521
    %534 = vmatpush.bf16.msra.mxu0 %v520
    %535 = vmatpush.bf16.msra.mxu0 %v519
    %536 = vmatpush.bf16.msra.mxu0 %v518
    %537 = vmatmul.bf16.gmra.mxu0 %v527
    %v538 = vpop.f32.mrf.mxu0
    %v539 = vadd.f32 0.0, %v538
    %v540 = vpop.f32.mrf.mxu0
    %541 = vdwg.mxu0
    %v550 = vunpack.c.l.b16 %v480
    %v551 = vunpack.c.l.b16 %v481
    %v552 = vunpack.c.l.b16 %v482
    %v553 = vunpack.c.l.b16 %v483
    %v554 = vunpack.c.l.b16 %v484
    %v555 = vunpack.c.l.b16 %v485
    %v556 = vunpack.c.l.b16 %v486
    %v557 = vunpack.c.l.b16 %v487
    %v558 = vpack.c.b16 %v551, %v550
    %v559 = vpack.c.b16 %v553, %v552
    %v560 = vpack.c.b16 %v555, %v554
    %v561 = vpack.c.b16 %v557, %v556
    %v567 = vsel %vm57, %v290, 0
    %569 = vmatpush.bf16.msra.mxu0 0
    %570 = vmatpush.bf16.msra.mxu0 0
    %571 = vmatpush.bf16.msra.mxu0 0
    %572 = vmatpush.bf16.msra.mxu0 0
    %573 = vmatpush.bf16.msra.mxu0 %v561
    %574 = vmatpush.bf16.msra.mxu0 %v560
    %575 = vmatpush.bf16.msra.mxu0 %v559
    %576 = vmatpush.bf16.msra.mxu0 %v558
    %577 = vmatmul.bf16.gmra.mxu0 %v567
    %v578 = vpop.f32.mrf.mxu0
    %v579 = vadd.f32 %v539, %v578
    %v580 = vpop.f32.mrf.mxu0
    %581 = vdwg.mxu0
    %s582 = scalar_lea.vmem %s3, 64
    %v583 = vld [vmem:[%s582] sm:$0xf]
    %v584 = vld [vmem:[%s582 + $0x4] sm:$0xf]
    %v585 = vld [vmem:[%s582 + $0x8] sm:$0xf]
    %v586 = vld [vmem:[%s582 + $0xc] sm:$0xf]
    %v587 = vld [vmem:[%s582 + $0x10] sm:$0xf]
    %v588 = vld [vmem:[%s582 + $0x14] sm:$0xf]
    %v589 = vld [vmem:[%s582 + $0x18] sm:$0xf]
    %v590 = vld [vmem:[%s582 + $0x1c] sm:$0xf]
    %v591 = vrot.slane %v498, 1
    %v600 = vunpack.c.l.b16 %v583
    %v601 = vunpack.c.l.b16 %v584
    %v602 = vunpack.c.l.b16 %v585
    %v603 = vunpack.c.l.b16 %v586
    %v604 = vunpack.c.l.b16 %v587
    %v605 = vunpack.c.l.b16 %v588
    %v606 = vunpack.c.l.b16 %v589
    %v607 = vunpack.c.l.b16 %v590
    %v608 = vpack.c.b16 %v601, %v600
    %v609 = vpack.c.b16 %v603, %v602
    %v610 = vpack.c.b16 %v605, %v604
    %v611 = vpack.c.b16 %v607, %v606
    %v617 = vsel %vm57, %v591, 0
    %619 = vmatpush.bf16.msra.mxu0 0
    %620 = vmatpush.bf16.msra.mxu0 0
    %621 = vmatpush.bf16.msra.mxu0 0
    %622 = vmatpush.bf16.msra.mxu0 0
    %623 = vmatpush.bf16.msra.mxu0 %v611
    %624 = vmatpush.bf16.msra.mxu0 %v610
    %625 = vmatpush.bf16.msra.mxu0 %v609
    %626 = vmatpush.bf16.msra.mxu0 %v608
    %627 = vmatmul.bf16.gmra.mxu0 %v617
    %v628 = vpop.f32.mrf.mxu0
    %v629 = vadd.f32 0.0, %v628
    %v630 = vpop.f32.mrf.mxu0
    %631 = vdwg.mxu0
    %v632 = vadd.f32 %v579, %v629
    %s633 = scalar_lea.vmem %s3, 96
    %v634 = vld [vmem:[%s633] sm:$0xf]
    %v635 = vld [vmem:[%s633 + $0x4] sm:$0xf]
    %v636 = vld [vmem:[%s633 + $0x8] sm:$0xf]
    %v637 = vld [vmem:[%s633 + $0xc] sm:$0xf]
    %v638 = vld [vmem:[%s633 + $0x10] sm:$0xf]
    %v639 = vld [vmem:[%s633 + $0x14] sm:$0xf]
    %v640 = vld [vmem:[%s633 + $0x18] sm:$0xf]
    %v641 = vld [vmem:[%s633 + $0x1c] sm:$0xf]
    %v642 = vrot.slane %v500, 1
    %v651 = vunpack.c.l.b16 %v634
    %v652 = vunpack.c.l.b16 %v635
    %v653 = vunpack.c.l.b16 %v636
    %v654 = vunpack.c.l.b16 %v637
    %v655 = vunpack.c.l.b16 %v638
    %v656 = vunpack.c.l.b16 %v639
    %v657 = vunpack.c.l.b16 %v640
    %v658 = vunpack.c.l.b16 %v641
    %v659 = vpack.c.b16 %v652, %v651
    %v660 = vpack.c.b16 %v654, %v653
    %v661 = vpack.c.b16 %v656, %v655
    %v662 = vpack.c.b16 %v658, %v657
    %v668 = vsel %vm57, %v642, 0
    %670 = vmatpush.bf16.msra.mxu0 0
    %671 = vmatpush.bf16.msra.mxu0 0
    %672 = vmatpush.bf16.msra.mxu0 0
    %673 = vmatpush.bf16.msra.mxu0 0
    %674 = vmatpush.bf16.msra.mxu0 %v662
    %675 = vmatpush.bf16.msra.mxu0 %v661
    %676 = vmatpush.bf16.msra.mxu0 %v660
    %677 = vmatpush.bf16.msra.mxu0 %v659
    %678 = vmatmul.bf16.gmra.mxu0 %v668
    %v679 = vpop.f32.mrf.mxu0
    %v680 = vadd.f32 0.0, %v679
    %v681 = vpop.f32.mrf.mxu0
    %682 = vdwg.mxu0
    %v683 = vadd.f32 %v632, %v680
    %s684 = sld [smem:[#allocation2 + $0xb]]
    %v685 = vstv %s684
    %v686 = vadd.f32 %v683, %v685
    %v687 = vperm.slane %v686, 0
    %v688 = vmul.f32 %v121, %v687
    %v689 = vadd.f32 %v688, %v121
    %s690 = sld [smem:[#allocation2 + $0x8]]
    %v691 = vstv %s690
    %v692 = vmul.f32 %v691, %v689
    %s693 = sld [smem:[#allocation2 + $0x9]]
    %v694 = vstv %s693
    %v695 = vmul.f32 %v694, %v55
    %v696 = vadd.f32 %v692, %v695
    %s697 = sld [smem:[#allocation2 + $0xa]]
    %v698 = vstv %s697
    %v699 = vmul.f32 %v698, %v479
    %v700 = vadd.f32 %v696, %v699
    %v701 = vadd.f32 %v55, %v700
    %v702 = vsel %vm57, %v701, 0.0
    %v703 = vrot.slane %v702, 4
    %v704 = vadd.f32 %v702, %v703
    %v705 = vrot.slane %v704, 2
    %v706 = vadd.f32 %v704, %v705
    %v707 = vrot.slane %v706, 1
    %v708 = vadd.f32 %v706, %v707
    %v709 = vrcp.pop 8.0
    %v710 = vmul.f32 8.0, %v709
    %v711 = vsub.f32 1.0, %v710
    %v712 = vmul.f32 %v709, %v711
    %v713 = vadd.f32 %v709, %v712
    %vm714 = vweird.f32 %v709
    %v715 = vsel %vm714, %v709, %v713
    %v716 = vmul.f32 %v708, %v715
    %v717 = vsub.f32 %v701, %v716
    %v718 = vmul.f32 %v717, %v717
    %v719 = vsel %vm57, %v718, 0.0
    %v720 = vrot.slane %v719, 4
    %v721 = vadd.f32 %v719, %v720
    %v722 = vrot.slane %v721, 2
    %v723 = vadd.f32 %v721, %v722
    %v724 = vrot.slane %v723, 1
    %v725 = vadd.f32 %v723, %v724
    %v726 = vmul.f32 %v725, %v715
    %v727 = vadd.f32 %v726, 1e-06
    %v728 = vrsqrt.pop %v727
    %v729 = vmul.f32 %v728, %v727
    %v730 = vmul.f32 %v729, %v728
    %v731 = vmul.f32 0.5, %v730
    %v732 = vsub.f32 1.5, %v731
    %v733 = vmul.f32 %v728, %v732
    %vm734 = vweird.f32 %v727
    %vm735 = vweird.f32 %v728
    %vm736 = vmor %vm734, %vm735
    %v737 = vsel %vm736, %v728, %v733
    %v738 = vmul.f32 %v717, %v737
    %739 = vset.pattern.permute.xlu0 2
    %740 = vperm.xlu0 %739, %v48
    %v741 = vpop.permute.xlu0 %740
    %v743 = vmul.f32 %v738, %v741
    %744 = vset.pattern.permute.xlu0 3
    %745 = vperm.xlu0 %744, %v48
    %v746 = vpop.permute.xlu0 %745
    %v748 = vadd.f32 %v743, %v746
    %v749 = vpack.c.bf16 %v748, %v748
    %750 = vset.pattern.permute.xlu0 0
    %751 = vperm.xlu0 %750, %v48
    %v752 = vpop.permute.xlu0 %751
    %754 = vset.pattern.permute.xlu0 0
    %755 = vperm.xlu0 %754, %v49
    %v756 = vpop.permute.xlu0 %755
    %759 = vset.pattern.permute.xlu0 0
    %760 = vperm.xlu0 %759, %v50
    %v761 = vpop.permute.xlu0 %760
    %764 = vset.pattern.permute.xlu0 0
    %765 = vperm.xlu0 %764, %v51
    %v766 = vpop.permute.xlu0 %765
    %v772 = vunpack.c.l.b16 %v43
    %v773 = vunpack.c.l.b16 %v44
    %v774 = vunpack.c.l.b16 %v45
    %v775 = vunpack.c.l.b16 %v46
    %v776 = vpack.c.b16 %v773, %v772
    %v777 = vpack.c.b16 %v775, %v774
    %v779 = vsel %vm179, %v776, 0
    %v782 = vsel %vm179, %v777, 0
    %v785 = vsel %vm224, %v749, 0
    %787 = vmatpush.bf16.msra.mxu0 0
    %788 = vmatpush.bf16.msra.mxu0 0
    %789 = vmatpush.bf16.msra.mxu0 0
    %790 = vmatpush.bf16.msra.mxu0 0
    %791 = vmatpush.bf16.msra.mxu0 0
    %792 = vmatpush.bf16.msra.mxu0 0
    %793 = vmatpush.bf16.msra.mxu0 0
    %794 = vmatpush.bf16.msra.mxu0 %v785
    %795 = vmatmul.bf16.gmra.mxu0 %v779
    %v796 = vpop.f32.mrf.mxu0
    %v797 = vadd.f32 %v752, %v796
    %v798 = vpop.f32.mrf.mxu0
    %v799 = vadd.f32 %v756, %v798
    %800 = vmatmul.bf16.gmra.mxu0 %v782
    %v801 = vpop.f32.mrf.mxu0
    %v802 = vadd.f32 %v761, %v801
    %v803 = vpop.f32.mrf.mxu0
    %v804 = vadd.f32 %v766, %v803
    %805 = vdwg.mxu0
    %v806 = vmul.f32 %v797, 0.5
    %v807 = vmul.f32 %v799, 0.5
    %v808 = vmul.f32 %v802, 0.5
    %v809 = vmul.f32 %v804, 0.5
    %v810 = vmul.f32 %v797, 0.044715
    %v811 = vmul.f32 %v799, 0.044715
    %v812 = vmul.f32 %v802, 0.044715
    %v813 = vmul.f32 %v804, 0.044715
    %v814 = vmul.f32 %v810, %v797
    %v815 = vmul.f32 %v811, %v799
    %v816 = vmul.f32 %v812, %v802
    %v817 = vmul.f32 %v813, %v804
    %v818 = vmul.f32 %v814, %v797
    %v819 = vmul.f32 %v815, %v799
    %v820 = vmul.f32 %v816, %v802
    %v821 = vmul.f32 %v817, %v804
    %v822 = vadd.f32 %v797, %v818
    %v823 = vadd.f32 %v799, %v819
    %v824 = vadd.f32 %v802, %v820
    %v825 = vadd.f32 %v804, %v821
    %v826 = vmul.f32 %v822, 0.7978846
    %v827 = vmul.f32 %v823, 0.7978846
    %v828 = vmul.f32 %v824, 0.7978846
    %v829 = vmul.f32 %v825, 0.7978846
    %v830 = vtanh.pop %v826
    %v831 = vtanh.pop %v827
    %v832 = vtanh.pop %v828
    %v833 = vtanh.pop %v829
    %v834 = vadd.f32 %v830, 1.0
    %v835 = vadd.f32 %v831, 1.0
    %v836 = vadd.f32 %v832, 1.0
    %v837 = vadd.f32 %v833, 1.0
    %v838 = vmul.f32 %v806, %v834
    %v839 = vmul.f32 %v807, %v835
    %v840 = vmul.f32 %v808, %v836
    %v841 = vmul.f32 %v809, %v837
    %v842 = vpack.c.bf16 %v839, %v838
    %v843 = vpack.c.bf16 %v841, %v840
    %vm844 = vcmask 261120
    %v846 = vsel %vm844, %v47, 0
    %848 = vmatpush.bf16.msra.mxu0 0
    %849 = vmatpush.bf16.msra.mxu0 0
    %850 = vmatpush.bf16.msra.mxu0 0
    %851 = vmatpush.bf16.msra.mxu0 0
    %852 = vmatpush.bf16.msra.mxu0 0
    %853 = vmatpush.bf16.msra.mxu0 0
    %854 = vmatpush.bf16.msra.mxu0 %v843
    %855 = vmatpush.bf16.msra.mxu0 %v842
    %856 = vmatmul.bf16.gmra.mxu0 %v846
    %v857 = vpop.f32.mrf.mxu0
    %v858 = vadd.f32 0.0, %v857
    %v859 = vpop.f32.mrf.mxu0
    %860 = vdwg.mxu0
    %v861 = vadd.f32 %v748, %v858
    %862 = vset.pattern.permute.xlu0 6
    %863 = vperm.xlu0 %862, %v48
    %v864 = vpop.permute.xlu0 %863
    %v866 = vadd.f32 %v861, %v864
    %v867 = vsel %vm57, %v866, 0.0
    %v868 = vrot.slane %v867, 4
    %v869 = vadd.f32 %v867, %v868
    %v870 = vrot.slane %v869, 2
    %v871 = vadd.f32 %v869, %v870
    %v872 = vrot.slane %v871, 1
    %v873 = vadd.f32 %v871, %v872
    %v874 = vmul.f32 %v873, %v715
    %v875 = vsub.f32 %v866, %v874
    %v876 = vmul.f32 %v875, %v875
    %v877 = vsel %vm57, %v876, 0.0
    %v878 = vrot.slane %v877, 4
    %v879 = vadd.f32 %v877, %v878
    %v880 = vrot.slane %v879, 2
    %v881 = vadd.f32 %v879, %v880
    %v882 = vrot.slane %v881, 1
    %v883 = vadd.f32 %v881, %v882
    %v884 = vmul.f32 %v883, %v715
    %v885 = vadd.f32 %v884, 1e-06
    %v886 = vrsqrt.pop %v885
    %v887 = vmul.f32 %v886, %v885
    %v888 = vmul.f32 %v887, %v886
    %v889 = vmul.f32 0.5, %v888
    %v890 = vsub.f32 1.5, %v889
    %v891 = vmul.f32 %v886, %v890
    %vm892 = vweird.f32 %v885
    %vm893 = vweird.f32 %v886
    %vm894 = vmor %vm892, %vm893
    %v895 = vsel %vm894, %v886, %v891
    %v896 = vmul.f32 %v875, %v895
    %897 = vset.pattern.permute.xlu0 4
    %898 = vperm.xlu0 %897, %v48
    %v899 = vpop.permute.xlu0 %898
    %v901 = vmul.f32 %v896, %v899
    %902 = vset.pattern.permute.xlu0 5
    %903 = vperm.xlu0 %902, %v48
    %v904 = vpop.permute.xlu0 %903
    %v906 = vadd.f32 %v901, %v904
    %s907 = scalar_lea.vmem %s0, 8
    %v908 = vld [vmem:[%s907] sm:$0xff]
    %v909 = vpack.c.bf16 %v908, %v908
    %v910 = vsel %vm57, %v908, 0.0
    %911 = vadd.xlane.f32.xlu0 %v910
    %v912 = vpop.xlane.xlu0 %911
    %v913 = vmul.f32 %v912, %v67
    %v915 = vrot.slane %v913, 7
    %v917 = vsel %vm73, %v915, %v915
    %v918 = vsel %vm69, %v917, 0.0
    %v919 = vrot.slane %v913, 1
    %v921 = vsel %vm79, %v919, %v919
    %v922 = vsel %vm76, %v921, 0.0
    %v923 = vmul.f32 %v83, %v918
    %v924 = vmul.f32 %v86, %v913
    %v925 = vadd.f32 %v923, %v924
    %v926 = vmul.f32 %v90, %v922
    %v927 = vadd.f32 %v925, %v926
    %v928 = vadd.f32 %v927, %v94
    %v929 = vxor.u32 %v928, 2147483648
    %v930 = vmul.f32 %v929, 1.442695
    %v931 = vpow.pop %v930
    %v932 = vadd.f32 %v931, 1.0
    %v933 = vrcp.pop %v932
    %v934 = vmul.f32 %v932, %v933
    %v935 = vsub.f32 1.0, %v934
    %v936 = vmul.f32 %v933, %v935
    %v937 = vadd.f32 %v933, %v936
    %vm938 = vweird.f32 %v932
    %vm939 = vweird.f32 %v933
    %vm940 = vmor %vm938, %vm939
    %v941 = vsel %vm940, %v933, %v937
    %v942 = vand.u32 2147483647, %v932
    %vm943 = vcmp.eq.f32.partialorder %v942, 8.507059e+37
    %v944 = vand.u32 %v932, 2147483648
    %v945 = vor.u32 1.1754944e-38, %v944
    %v946 = vsel %vm943, %v945, %v941
    %v947 = vmul.f32 1.0, %v946
    %949 = vset.pattern.permute.xlu0 0
    %950 = vperm.xlu0 %949, %v947
    %v951 = vpop.permute.xlu0 %950
    %v953 = vmul.f32 %v908, %v951
    %v954 = vadd.f32 %v953, %v908
    %v955 = vmul.f32 %v123, %v918
    %v956 = vmul.f32 %v126, %v913
    %v957 = vadd.f32 %v955, %v956
    %v958 = vmul.f32 %v130, %v922
    %v959 = vadd.f32 %v957, %v958
    %v960 = vadd.f32 %v959, %v134
    %v961 = vxor.u32 %v960, 2147483648
    %v962 = vmul.f32 %v961, 1.442695
    %v963 = vpow.pop %v962
    %v964 = vadd.f32 %v963, 1.0
    %v965 = vrcp.pop %v964
    %v966 = vmul.f32 %v964, %v965
    %v967 = vsub.f32 1.0, %v966
    %v968 = vmul.f32 %v965, %v967
    %v969 = vadd.f32 %v965, %v968
    %vm970 = vweird.f32 %v964
    %vm971 = vweird.f32 %v965
    %vm972 = vmor %vm970, %vm971
    %v973 = vsel %vm972, %v965, %v969
    %v974 = vand.u32 2147483647, %v964
    %vm975 = vcmp.eq.f32.partialorder %v974, 8.507059e+37
    %v976 = vand.u32 %v964, 2147483648
    %v977 = vor.u32 1.1754944e-38, %v976
    %v978 = vsel %vm975, %v977, %v973
    %v979 = vmul.f32 1.0, %v978
    %v981 = vsel %vm155, %v979, 0
    %983 = vmatpush.xpose.msra.mxu0 0.0
    %984 = vmatpush.xpose.msra.mxu0 0.0
    %985 = vmatpush.xpose.msra.mxu0 0.0
    %986 = vmatpush.xpose.msra.mxu0 0.0
    %987 = vmatpush.xpose.msra.mxu0 0.0
    %988 = vmatpush.xpose.msra.mxu0 0.0
    %989 = vmatpush.xpose.msra.mxu0 0.0
    %990 = vmatpush.xpose.msra.mxu0 0.0
    %991 = vmatpush.xpose.msra.mxu0 0.0
    %992 = vmatpush.xpose.msra.mxu0 0.0
    %993 = vmatpush.xpose.msra.mxu0 0.0
    %994 = vmatpush.xpose.msra.mxu0 0.0
    %995 = vmatpush.xpose.msra.mxu0 0.0
    %996 = vmatpush.xpose.msra.mxu0 0.0
    %997 = vmatpush.xpose.msra.mxu0 0.0
    %998 = vmatpush.xpose.msra.mxu0 %v981
    %999 = vmatmul.f32.gmra.mxu0 %v981
    %v1000 = vpop.f32.mrf.mxu0
    %v1001 = vadd.f32 0.0, %v1000
    %1002 = vdwg.mxu0
    %v1003 = vsel %vm179, %v1001, -inf
    %1004 = vmax.xlane.f32.xlu0 %v1003
    %v1005 = vpop.xlane.xlu0 %1004
    %v1006 = vrot.slane %v1005, 4
    %v1007 = vmax.f32 %v1005, %v1006
    %v1008 = vrot.slane %v1007, 2
    %v1009 = vmax.f32 %v1007, %v1008
    %v1010 = vrot.slane %v1009, 1
    %v1011 = vmax.f32 %v1009, %v1010
    %s1012 = vtos %v1011
    %v1013 = vstv %s1012
    %v1014 = vsub.f32 %v1001, %v1013
    %v1015 = vmul.f32 %v1014, 1.442695
    %v1016 = vpow.pop %v1015
    %v1017 = vsel %vm179, %v1016, 0.0
    %1018 = vadd.xlane.f32.xlu0 %v1017
    %v1019 = vpop.xlane.xlu0 %1018
    %v1020 = vrot.slane %v1019, 4
    %v1021 = vadd.f32 %v1019, %v1020
    %v1022 = vrot.slane %v1021, 2
    %v1023 = vadd.f32 %v1021, %v1022
    %v1024 = vrot.slane %v1023, 1
    %v1025 = vadd.f32 %v1023, %v1024
    %s1026 = vtos %v1025
    %v1027 = vstv %s1026
    %v1028 = vrcp.pop %v1027
    %v1029 = vmul.f32 %v1027, %v1028
    %v1030 = vsub.f32 1.0, %v1029
    %v1031 = vmul.f32 %v1028, %v1030
    %v1032 = vadd.f32 %v1028, %v1031
    %vm1033 = vweird.f32 %v1027
    %vm1034 = vweird.f32 %v1028
    %vm1035 = vmor %vm1033, %vm1034
    %v1036 = vsel %vm1035, %v1028, %v1032
    %v1037 = vand.u32 2147483647, %v1027
    %vm1038 = vcmp.eq.f32.partialorder %v1037, 8.507059e+37
    %v1039 = vand.u32 %v1027, 2147483648
    %v1040 = vor.u32 1.1754944e-38, %v1039
    %v1041 = vsel %vm1038, %v1040, %v1036
    %v1042 = vmul.f32 %v1016, %v1041
    %v1043 = vpack.c.bf16 %v1042, %v1042
    %v1045 = vsel %vm179, %v1043, 0
    %v1048 = vsel %vm224, %v909, 0
    %1050 = vmatpush.bf16.msra.mxu0 0
    %1051 = vmatpush.bf16.msra.mxu0 0
    %1052 = vmatpush.bf16.msra.mxu0 0
    %1053 = vmatpush.bf16.msra.mxu0 0
    %1054 = vmatpush.bf16.msra.mxu0 0
    %1055 = vmatpush.bf16.msra.mxu0 0
    %1056 = vmatpush.bf16.msra.mxu0 0
    %1057 = vmatpush.bf16.msra.mxu0 %v1048
    %1058 = vmatmul.bf16.gmra.mxu0 %v1045
    %v1059 = vpop.f32.mrf.mxu0
    %v1060 = vadd.f32 0.0, %v1059
    %v1061 = vpop.f32.mrf.mxu0
    %1062 = vdwg.mxu0
    %v1063 = vmul.f32 %v908, %v1060
    %1064 = vmatpush.bf16.msra.mxu0 0
    %1065 = vmatpush.bf16.msra.mxu0 0
    %1066 = vmatpush.bf16.msra.mxu0 0
    %1067 = vmatpush.bf16.msra.mxu0 0
    %1068 = vmatpush.bf16.msra.mxu0 0
    %1069 = vmatpush.bf16.msra.mxu0 0
    %1070 = vmatpush.bf16.msra.mxu0 0
    %1071 = vmatpush.bf16.msra.mxu0 %v1048
    %1072 = vmatmul.bf16.gmra.mxu0 %v266
    %v1073 = vpop.f32.mrf.mxu0
    %v1074 = vadd.f32 %v245, %v1073
    %v1075 = vpop.f32.mrf.mxu0
    %v1076 = vadd.f32 %v250, %v1075
    %1077 = vmatmul.bf16.gmra.mxu0 %v269
    %v1078 = vpop.f32.mrf.mxu0
    %v1079 = vadd.f32 %v255, %v1078
    %v1080 = vpop.f32.mrf.mxu0
    %1081 = vdwg.mxu0
    %v1082 = vpack.c.bf16 %v1076, %v1076
    %v1083 = vpack.c.bf16 %v1074, %v1074
    %1084 = vxpose.xlu0.c.b16.start [1/8] %v1082, 128
    %1085 = vxpose.xlu0.c.b16.cont [2/8] 0, 128
    %1086 = vxpose.xlu0.c.b16.cont [3/8] 0, 128
    %1087 = vxpose.xlu0.c.b16.cont [4/8] 0, 128
    %1088 = vxpose.xlu0.c.b16.cont [5/8] 0, 128
    %1089 = vxpose.xlu0.c.b16.cont [6/8] 0, 128
    %1090 = vxpose.xlu0.c.b16.cont [7/8] 0, 128
    %1091 = vxpose.xlu0.c.b16.end [8/8] 0, 128
    %v1092 = vpop.trf.xlu0
    %v1093 = vpop.trf.xlu0
    %v1094 = vpop.trf.xlu0
    %v1095 = vpop.trf.xlu0
    %v1096 = vpop.trf.xlu0
    %v1097 = vpop.trf.xlu0
    %v1098 = vpop.trf.xlu0
    %v1099 = vpop.trf.xlu0
    %v1101 = vrot.slane %v1083, 2
    %v1103 = vsel %vm309, %v1092, 0
    %v1106 = vsel %vm309, %v1093, 0
    %v1109 = vsel %vm309, %v1094, 0
    %v1112 = vsel %vm309, %v1095, 0
    %v1115 = vsel %vm322, %v1101, 0
    %1117 = vmatpush.bf16.msra.mxu0 0
    %1118 = vmatpush.bf16.msra.mxu0 0
    %1119 = vmatpush.bf16.msra.mxu0 0
    %1120 = vmatpush.bf16.msra.mxu0 0
    %1121 = vmatpush.bf16.msra.mxu0 0
    %1122 = vmatpush.bf16.msra.mxu0 0
    %1123 = vmatpush.bf16.msra.mxu0 0
    %1124 = vmatpush.bf16.msra.mxu0 %v1115
    %1125 = vmatmul.bf16.gmra.mxu0 %v1103
    %v1126 = vpop.f32.mrf.mxu0
    %v1127 = vadd.f32 0.0, %v1126
    %v1128 = vpop.f32.mrf.mxu0
    %v1129 = vadd.f32 0.0, %v1128
    %1130 = vmatmul.bf16.gmra.mxu0 %v1106
    %v1131 = vpop.f32.mrf.mxu0
    %v1132 = vadd.f32 0.0, %v1131
    %v1133 = vpop.f32.mrf.mxu0
    %v1134 = vadd.f32 0.0, %v1133
    %1135 = vmatmul.bf16.gmra.mxu0 %v1109
    %v1136 = vpop.f32.mrf.mxu0
    %v1137 = vadd.f32 0.0, %v1136
    %v1138 = vpop.f32.mrf.mxu0
    %v1139 = vadd.f32 0.0, %v1138
    %1140 = vmatmul.bf16.gmra.mxu0 %v1112
    %v1141 = vpop.f32.mrf.mxu0
    %v1142 = vadd.f32 0.0, %v1141
    %v1143 = vpop.f32.mrf.mxu0
    %v1144 = vadd.f32 0.0, %v1143
    %1145 = vdwg.mxu0
    %v1146 = vsel %vm57, %v1127, -inf
    %v1147 = vsel %vm57, %v1129, -inf
    %v1148 = vsel %vm57, %v1132, -inf
    %v1149 = vsel %vm57, %v1134, -inf
    %v1150 = vsel %vm57, %v1137, -inf
    %v1151 = vmax.f32 %v1146, %v1150
    %v1152 = vsel %vm57, %v1139, -inf
    %v1153 = vmax.f32 %v1147, %v1152
    %v1154 = vsel %vm57, %v1142, -inf
    %v1155 = vmax.f32 %v1148, %v1154
    %v1156 = vsel %vm57, %v1144, -inf
    %v1157 = vmax.f32 %v1149, %v1156
    %v1158 = vmax.f32 %v1151, %v1153
    %v1159 = vmax.f32 %v1155, %v1157
    %v1160 = vmax.f32 %v1158, %v1159
    %1161 = vmax.xlane.f32.xlu0 %v1160
    %v1162 = vpop.xlane.xlu0 %1161
    %v1163 = vrot.slane %v1162, 4
    %v1164 = vmax.f32 %v1162, %v1163
    %v1165 = vrot.slane %v1164, 2
    %v1166 = vmax.f32 %v1164, %v1165
    %v1167 = vrot.slane %v1166, 1
    %v1168 = vmax.f32 %v1166, %v1167
    %s1169 = vtos %v1168
    %v1170 = vstv %s1169
    %v1171 = vsub.f32 %v1127, %v1170
    %v1172 = vsub.f32 %v1129, %v1170
    %v1173 = vsub.f32 %v1132, %v1170
    %v1174 = vsub.f32 %v1134, %v1170
    %v1175 = vsub.f32 %v1137, %v1170
    %v1176 = vsub.f32 %v1139, %v1170
    %v1177 = vsub.f32 %v1142, %v1170
    %v1178 = vsub.f32 %v1144, %v1170
    %v1179 = vmul.f32 %v1171, 1.442695
    %v1180 = vpow.pop %v1179
    %v1181 = vmul.f32 %v1172, 1.442695
    %v1182 = vpow.pop %v1181
    %v1183 = vmul.f32 %v1173, 1.442695
    %v1184 = vpow.pop %v1183
    %v1185 = vmul.f32 %v1174, 1.442695
    %v1186 = vpow.pop %v1185
    %v1187 = vmul.f32 %v1175, 1.442695
    %v1188 = vpow.pop %v1187
    %v1189 = vmul.f32 %v1176, 1.442695
    %v1190 = vpow.pop %v1189
    %v1191 = vmul.f32 %v1177, 1.442695
    %v1192 = vpow.pop %v1191
    %v1193 = vmul.f32 %v1178, 1.442695
    %v1194 = vpow.pop %v1193
    %v1195 = vsel %vm57, %v1180, 0.0
    %v1196 = vsel %vm57, %v1182, 0.0
    %v1197 = vadd.f32 %v1195, %v1196
    %v1198 = vsel %vm57, %v1184, 0.0
    %v1199 = vadd.f32 %v1197, %v1198
    %v1200 = vsel %vm57, %v1186, 0.0
    %v1201 = vadd.f32 %v1199, %v1200
    %v1202 = vsel %vm57, %v1188, 0.0
    %v1203 = vadd.f32 %v1201, %v1202
    %v1204 = vsel %vm57, %v1190, 0.0
    %v1205 = vadd.f32 %v1203, %v1204
    %v1206 = vsel %vm57, %v1192, 0.0
    %v1207 = vadd.f32 %v1205, %v1206
    %v1208 = vsel %vm57, %v1194, 0.0
    %v1209 = vadd.f32 %v1207, %v1208
    %1210 = vadd.xlane.f32.xlu0 %v1209
    %v1211 = vpop.xlane.xlu0 %1210
    %v1212 = vrot.slane %v1211, 4
    %v1213 = vadd.f32 %v1211, %v1212
    %v1214 = vrot.slane %v1213, 2
    %v1215 = vadd.f32 %v1213, %v1214
    %v1216 = vrot.slane %v1215, 1
    %v1217 = vadd.f32 %v1215, %v1216
    %s1218 = vtos %v1217
    %v1219 = vstv %s1218
    %v1220 = vrcp.pop %v1219
    %v1221 = vmul.f32 %v1219, %v1220
    %v1222 = vsub.f32 1.0, %v1221
    %v1223 = vmul.f32 %v1220, %v1222
    %v1224 = vadd.f32 %v1220, %v1223
    %vm1225 = vweird.f32 %v1219
    %vm1226 = vweird.f32 %v1220
    %vm1227 = vmor %vm1225, %vm1226
    %v1228 = vsel %vm1227, %v1220, %v1224
    %v1229 = vand.u32 2147483647, %v1219
    %vm1230 = vcmp.eq.f32.partialorder %v1229, 8.507059e+37
    %v1231 = vand.u32 %v1219, 2147483648
    %v1232 = vor.u32 1.1754944e-38, %v1231
    %v1233 = vsel %vm1230, %v1232, %v1228
    %v1234 = vmul.f32 %v1180, %v1233
    %v1235 = vmul.f32 %v1182, %v1233
    %v1236 = vmul.f32 %v1184, %v1233
    %v1237 = vmul.f32 %v1186, %v1233
    %v1238 = vmul.f32 %v1188, %v1233
    %v1239 = vmul.f32 %v1190, %v1233
    %v1240 = vmul.f32 %v1192, %v1233
    %v1241 = vmul.f32 %v1194, %v1233
    %v1242 = vpack.c.bf16 %v1079, %v1076
    %v1243 = vpack.c.bf16 %v1235, %v1234
    %v1244 = vpack.c.bf16 %v1237, %v1236
    %v1245 = vpack.c.bf16 %v1239, %v1238
    %v1246 = vpack.c.bf16 %v1241, %v1240
    %v1248 = vrot.slane %v1242, 2
    %v1250 = vsel %vm57, %v1248, 0
    %1252 = vmatpush.bf16.msra.mxu0 0
    %1253 = vmatpush.bf16.msra.mxu0 0
    %1254 = vmatpush.bf16.msra.mxu0 0
    %1255 = vmatpush.bf16.msra.mxu0 0
    %1256 = vmatpush.bf16.msra.mxu0 %v1246
    %1257 = vmatpush.bf16.msra.mxu0 %v1245
    %1258 = vmatpush.bf16.msra.mxu0 %v1244
    %1259 = vmatpush.bf16.msra.mxu0 %v1243
    %1260 = vmatmul.bf16.gmra.mxu0 %v1250
    %v1261 = vpop.f32.mrf.mxu0
    %v1262 = vadd.f32 %v458, %v1261
    %v1263 = vpop.f32.mrf.mxu0
    %1264 = vdwg.mxu0
    %v1265 = vmul.f32 %v1063, %v1262
    %v1266 = vadd.f32 %v1265, %v1063
    %v1267 = vunpack.c.l.b16 %v1083
    %v1268 = vpack.c.b16 %v1267, %v1267
    %v1270 = vshrl.u32 %v1268, 16
    %v1273 = vsel %vm57, %v1270, 0
    %1275 = vmatpush.bf16.msra.mxu0 0
    %1276 = vmatpush.bf16.msra.mxu0 0
    %1277 = vmatpush.bf16.msra.mxu0 0
    %1278 = vmatpush.bf16.msra.mxu0 0
    %1279 = vmatpush.bf16.msra.mxu0 %v521
    %1280 = vmatpush.bf16.msra.mxu0 %v520
    %1281 = vmatpush.bf16.msra.mxu0 %v519
    %1282 = vmatpush.bf16.msra.mxu0 %v518
    %1283 = vmatmul.bf16.gmra.mxu0 %v1273
    %v1284 = vpop.f32.mrf.mxu0
    %v1285 = vadd.f32 0.0, %v1284
    %v1286 = vpop.f32.mrf.mxu0
    %1287 = vdwg.mxu0
    %v1289 = vsel %vm57, %v1083, 0
    %1291 = vmatpush.bf16.msra.mxu0 0
    %1292 = vmatpush.bf16.msra.mxu0 0
    %1293 = vmatpush.bf16.msra.mxu0 0
    %1294 = vmatpush.bf16.msra.mxu0 0
    %1295 = vmatpush.bf16.msra.mxu0 %v561
    %1296 = vmatpush.bf16.msra.mxu0 %v560
    %1297 = vmatpush.bf16.msra.mxu0 %v559
    %1298 = vmatpush.bf16.msra.mxu0 %v558
    %1299 = vmatmul.bf16.gmra.mxu0 %v1289
    %v1300 = vpop.f32.mrf.mxu0
    %v1301 = vadd.f32 %v1285, %v1300
    %v1302 = vpop.f32.mrf.mxu0
    %1303 = vdwg.mxu0
    %v1304 = vrot.slane %v1268, 1
    %v1306 = vsel %vm57, %v1304, 0
    %1308 = vmatpush.bf16.msra.mxu0 0
    %1309 = vmatpush.bf16.msra.mxu0 0
    %1310 = vmatpush.bf16.msra.mxu0 0
    %1311 = vmatpush.bf16.msra.mxu0 0
    %1312 = vmatpush.bf16.msra.mxu0 %v611
    %1313 = vmatpush.bf16.msra.mxu0 %v610
    %1314 = vmatpush.bf16.msra.mxu0 %v609
    %1315 = vmatpush.bf16.msra.mxu0 %v608
    %1316 = vmatmul.bf16.gmra.mxu0 %v1306
    %v1317 = vpop.f32.mrf.mxu0
    %v1318 = vadd.f32 0.0, %v1317
    %v1319 = vpop.f32.mrf.mxu0
    %1320 = vdwg.mxu0
    %v1321 = vadd.f32 %v1301, %v1318
    %v1322 = vrot.slane %v1270, 1
    %v1324 = vsel %vm57, %v1322, 0
    %1326 = vmatpush.bf16.msra.mxu0 0
    %1327 = vmatpush.bf16.msra.mxu0 0
    %1328 = vmatpush.bf16.msra.mxu0 0
    %1329 = vmatpush.bf16.msra.mxu0 0
    %1330 = vmatpush.bf16.msra.mxu0 %v662
    %1331 = vmatpush.bf16.msra.mxu0 %v661
    %1332 = vmatpush.bf16.msra.mxu0 %v660
    %1333 = vmatpush.bf16.msra.mxu0 %v659
    %1334 = vmatmul.bf16.gmra.mxu0 %v1324
    %v1335 = vpop.f32.mrf.mxu0
    %v1336 = vadd.f32 0.0, %v1335
    %v1337 = vpop.f32.mrf.mxu0
    %1338 = vdwg.mxu0
    %v1339 = vadd.f32 %v1321, %v1336
    %v1340 = vadd.f32 %v1339, %v685
    %v1341 = vperm.slane %v1340, 0
    %v1342 = vmul.f32 %v954, %v1341
    %v1343 = vadd.f32 %v1342, %v954
    %v1344 = vmul.f32 %v691, %v1343
    %v1345 = vmul.f32 %v694, %v908
    %v1346 = vadd.f32 %v1344, %v1345
    %v1347 = vmul.f32 %v698, %v1266
    %v1348 = vadd.f32 %v1346, %v1347
    %v1349 = vadd.f32 %v908, %v1348
    %v1350 = vsel %vm57, %v1349, 0.0
    %v1351 = vrot.slane %v1350, 4
    %v1352 = vadd.f32 %v1350, %v1351
    %v1353 = vrot.slane %v1352, 2
    %v1354 = vadd.f32 %v1352, %v1353
    %v1355 = vrot.slane %v1354, 1
    %v1356 = vadd.f32 %v1354, %v1355
    %v1357 = vmul.f32 %v1356, %v715
    %v1358 = vsub.f32 %v1349, %v1357
    %v1359 = vmul.f32 %v1358, %v1358
    %v1360 = vsel %vm57, %v1359, 0.0
    %v1361 = vrot.slane %v1360, 4
    %v1362 = vadd.f32 %v1360, %v1361
    %v1363 = vrot.slane %v1362, 2
    %v1364 = vadd.f32 %v1362, %v1363
    %v1365 = vrot.slane %v1364, 1
    %v1366 = vadd.f32 %v1364, %v1365
    %v1367 = vmul.f32 %v1366, %v715
    %v1368 = vadd.f32 %v1367, 1e-06
    %v1369 = vrsqrt.pop %v1368
    %v1370 = vmul.f32 %v1369, %v1368
    %v1371 = vmul.f32 %v1370, %v1369
    %v1372 = vmul.f32 0.5, %v1371
    %v1373 = vsub.f32 1.5, %v1372
    %v1374 = vmul.f32 %v1369, %v1373
    %vm1375 = vweird.f32 %v1368
    %vm1376 = vweird.f32 %v1369
    %vm1377 = vmor %vm1375, %vm1376
    %v1378 = vsel %vm1377, %v1369, %v1374
    %v1379 = vmul.f32 %v1358, %v1378
    %v1380 = vmul.f32 %v1379, %v741
    %v1381 = vadd.f32 %v1380, %v746
    %v1382 = vpack.c.bf16 %v1381, %v1381
    %v1384 = vsel %vm224, %v1382, 0
    %1386 = vmatpush.bf16.msra.mxu0 0
    %1387 = vmatpush.bf16.msra.mxu0 0
    %1388 = vmatpush.bf16.msra.mxu0 0
    %1389 = vmatpush.bf16.msra.mxu0 0
    %1390 = vmatpush.bf16.msra.mxu0 0
    %1391 = vmatpush.bf16.msra.mxu0 0
    %1392 = vmatpush.bf16.msra.mxu0 0
    %1393 = vmatpush.bf16.msra.mxu0 %v1384
    %1394 = vmatmul.bf16.gmra.mxu0 %v779
    %v1395 = vpop.f32.mrf.mxu0
    %v1396 = vadd.f32 %v752, %v1395
    %v1397 = vpop.f32.mrf.mxu0
    %v1398 = vadd.f32 %v756, %v1397
    %1399 = vmatmul.bf16.gmra.mxu0 %v782
    %v1400 = vpop.f32.mrf.mxu0
    %v1401 = vadd.f32 %v761, %v1400
    %v1402 = vpop.f32.mrf.mxu0
    %v1403 = vadd.f32 %v766, %v1402
    %1404 = vdwg.mxu0
    %v1405 = vmul.f32 %v1396, 0.5
    %v1406 = vmul.f32 %v1398, 0.5
    %v1407 = vmul.f32 %v1401, 0.5
    %v1408 = vmul.f32 %v1403, 0.5
    %v1409 = vmul.f32 %v1396, 0.044715
    %v1410 = vmul.f32 %v1398, 0.044715
    %v1411 = vmul.f32 %v1401, 0.044715
    %v1412 = vmul.f32 %v1403, 0.044715
    %v1413 = vmul.f32 %v1409, %v1396
    %v1414 = vmul.f32 %v1410, %v1398
    %v1415 = vmul.f32 %v1411, %v1401
    %v1416 = vmul.f32 %v1412, %v1403
    %v1417 = vmul.f32 %v1413, %v1396
    %v1418 = vmul.f32 %v1414, %v1398
    %v1419 = vmul.f32 %v1415, %v1401
    %v1420 = vmul.f32 %v1416, %v1403
    %v1421 = vadd.f32 %v1396, %v1417
    %v1422 = vadd.f32 %v1398, %v1418
    %v1423 = vadd.f32 %v1401, %v1419
    %v1424 = vadd.f32 %v1403, %v1420
    %v1425 = vmul.f32 %v1421, 0.7978846
    %v1426 = vmul.f32 %v1422, 0.7978846
    %v1427 = vmul.f32 %v1423, 0.7978846
    %v1428 = vmul.f32 %v1424, 0.7978846
    %v1429 = vtanh.pop %v1425
    %v1430 = vtanh.pop %v1426
    %v1431 = vtanh.pop %v1427
    %v1432 = vtanh.pop %v1428
    %v1433 = vadd.f32 %v1429, 1.0
    %v1434 = vadd.f32 %v1430, 1.0
    %v1435 = vadd.f32 %v1431, 1.0
    %v1436 = vadd.f32 %v1432, 1.0
    %v1437 = vmul.f32 %v1405, %v1433
    %v1438 = vmul.f32 %v1406, %v1434
    %v1439 = vmul.f32 %v1407, %v1435
    %v1440 = vmul.f32 %v1408, %v1436
    %v1441 = vpack.c.bf16 %v1438, %v1437
    %v1442 = vpack.c.bf16 %v1440, %v1439
    %1443 = vmatpush.bf16.msra.mxu0 0
    %1444 = vmatpush.bf16.msra.mxu0 0
    %1445 = vmatpush.bf16.msra.mxu0 0
    %1446 = vmatpush.bf16.msra.mxu0 0
    %1447 = vmatpush.bf16.msra.mxu0 0
    %1448 = vmatpush.bf16.msra.mxu0 0
    %1449 = vmatpush.bf16.msra.mxu0 %v1442
    %1450 = vmatpush.bf16.msra.mxu0 %v1441
    %1451 = vmatmul.bf16.gmra.mxu0 %v846
    %v1452 = vpop.f32.mrf.mxu0
    %v1453 = vadd.f32 0.0, %v1452
    %v1454 = vpop.f32.mrf.mxu0
    %1455 = vdwg.mxu0
    %v1456 = vadd.f32 %v1381, %v1453
    %v1457 = vadd.f32 %v1456, %v864
    %v1458 = vsel %vm57, %v1457, 0.0
    %v1459 = vrot.slane %v1458, 4
    %v1460 = vadd.f32 %v1458, %v1459
    %v1461 = vrot.slane %v1460, 2
    %v1462 = vadd.f32 %v1460, %v1461
    %v1463 = vrot.slane %v1462, 1
    %v1464 = vadd.f32 %v1462, %v1463
    %v1465 = vmul.f32 %v1464, %v715
    %v1466 = vsub.f32 %v1457, %v1465
    %v1467 = vmul.f32 %v1466, %v1466
    %v1468 = vsel %vm57, %v1467, 0.0
    %v1469 = vrot.slane %v1468, 4
    %v1470 = vadd.f32 %v1468, %v1469
    %v1471 = vrot.slane %v1470, 2
    %v1472 = vadd.f32 %v1470, %v1471
    %v1473 = vrot.slane %v1472, 1
    %v1474 = vadd.f32 %v1472, %v1473
    %v1475 = vmul.f32 %v1474, %v715
    %v1476 = vadd.f32 %v1475, 1e-06
    %v1477 = vrsqrt.pop %v1476
    %v1478 = vmul.f32 %v1477, %v1476
    %v1479 = vmul.f32 %v1478, %v1477
    %v1480 = vmul.f32 0.5, %v1479
    %v1481 = vsub.f32 1.5, %v1480
    %v1482 = vmul.f32 %v1477, %v1481
    %vm1483 = vweird.f32 %v1476
    %vm1484 = vweird.f32 %v1477
    %vm1485 = vmor %vm1483, %vm1484
    %v1486 = vsel %vm1485, %v1477, %v1482
    %v1487 = vmul.f32 %v1466, %v1486
    %v1488 = vmul.f32 %v1487, %v899
    %v1489 = vadd.f32 %v1488, %v904
    %1491 = vrot.lane.b32.xlu0 %v1489, 64
    %v1492 = vpop.permute.xlu0 %1491
    %v1494 = vsel %vm57, %v906, %v1492
    %1495 = vst [vmem:[%s7] sm:$0xff] %v1494
    // Predicated region
    $region34: #{glam_block_forward.1} parent=1 // pred_check
      _
    $region35: #{glam_block_forward.1} parent=1 // pred_check_branch
      %1497 = sbr.rel (0) target = $region37
    $region36: #{glam_block_forward.1} parent=1 // pred_region
      _
    $region37: #{glam_block_forward.1} parent=1 // pred_fallthru
      _
    // Predicated region
    $region38: #{glam_block_forward.1} parent=1 // pred_check
      _
    $region39: #{glam_block_forward.1} parent=1 // pred_check_branch
      %1499 = sbr.rel (0) target = $region41
    $region40: #{glam_block_forward.1} parent=1 // pred_region
      _
    $region41: #{glam_block_forward.1} parent=1 // pred_fallthru
      _
    %1500 = vsyncpa [#allocation3], 1

</llo_original>
